<compile_context>
chip_gen: v6e
topology: v6e:2x2x1
jax: 0.10.0
libtpu: 0.0.40
codegen_flags: <defaults>
</compile_context>

<pallas_src>
import numpy as np
import jax
import jax.numpy as jnp
from jax.experimental import pallas as pl
from jax.experimental.pallas import tpu as pltpu


def _edge_msg_kernel(ef_ref, hsrc_ref, w1_ref, b1_ref, w2_ref, b2_ref, s_ref, m_ref):
    # Edge-conditioned weight generation: Linear -> ReLU -> Linear (MXU).
    h1 = jnp.dot(ef_ref[...], w1_ref[...],
                 preferred_element_type=jnp.float32) + b1_ref[...]
    h1 = jnp.maximum(h1, 0.0)
    # w2/b2 columns are pre-permuted in the wrapper so wflat[e, o*H + i] == W_e[i, o].
    wflat = jnp.dot(h1, w2_ref[...],
                    preferred_element_type=jnp.float32) + b2_ref[...]        # (te, H*H)

    # hrep[e, o*H + i] = h_src[e, i]: pure lane tiling (VPU/XLU), replacing the old
    # (te,Hp)@(Hp,H*H) replication matmul on the MXU.
    hsrc = hsrc_ref[...]
    H = hsrc.shape[-1]
    hrep = jnp.concatenate([hsrc] * H, axis=-1)                              # (te, H*H)

    # m[e, o] = sum_i h_src[e, i] * W_e[i, o] via one (te,HH)@(HH,H) selection matmul.
    m_ref[...] = jnp.dot(hrep * wflat, s_ref[...],
                         preferred_element_type=jnp.float32)                 # (te, H)


def _scatter_kernel(gdstT_ref, m_ref, nfres_ref, bias_ref, out_ref):
    k = pl.program_id(1)            # edge-tile (reduction) axis, innermost

    # Per-node-tile init: Identity residual + bias, folded once at k == 0.
    @pl.when(k == 0)
    def _():
        out_ref[...] = nfres_ref[...] + bias_ref[...]

    # Scatter-sum: contract the edge dim of the pre-transposed (tn, te) one-hot block.
    out_ref[...] += jnp.dot(gdstT_ref[...], m_ref[...],
                            preferred_element_type=jnp.float32)


def dgl_mpnn_layer(nf, ef, src, dst, params, *, te=128, tn=128):
    """nf: (N,H) node feats, ef: (E,De) edge feats, src/dst: (E,) int32 edge endpoints.

    te: edge tile (128 on v5e/v7x; 256 worth trying on v6e).
    tn: node tile (>=128 to fill MXU rows; 256 on v6e/v7x).
    """
    N, H = nf.shape
    E, De = ef.shape
    w1, b1, w2, b2, bias = params
    Hm = w1.shape[1]
    HH = H * H

    # Pad edges / nodes up to tile multiples. Padded edges get zero source features and
    # an out-of-range dst (all-zero one-hot column), so they contribute nothing.
    Ep = ((E + te - 1) // te) * te
    Np = ((N + tn - 1) // tn) * tn
    ef_p = jnp.pad(ef, ((0, Ep - E), (0, 0)))
    hsrc = jnp.pad(nf[src], ((0, Ep - E), (0, 0)))           # pre-gathered in XLA (E,H)
    nf_p = jnp.pad(nf, ((0, Np - N), (0, 0)))
    dst_p = jnp.concatenate([dst.astype(jnp.int32),
                             jnp.full((Ep - E,), Np, jnp.int32)])
    # TODO(synk): O(E*N) dense scatter operator; replace with a scalar-prefetched /
    # sorted-segment scatter for large graphs.
    gdstT = jax.nn.one_hot(dst_p, Np, dtype=jnp.float32).T   # (Np, Ep), f32 end-to-end

    # Permute w2/b2 columns: new column o*H+i holds old column i*H+o, so the lane-tiled
    # hrep (h_src repeated H times) lines up elementwise with wflat.
    c = jnp.arange(HH)
    perm = (c % H) * H + (c // H)
    w2p = w2[:, perm]
    b2p = b2[:, perm]
    # Selection matrix: sums each contiguous group of H lanes into one output feature.
    S = ((c[:, None] // H) == jnp.arange(H)[None, :]).astype(jnp.float32)    # (HH, H)

    def _const(shape):
        nd = len(shape)
        return pl.BlockSpec(shape, lambda *_: (0,) * nd,
                            pipeline_mode=pl.Buffered(1))    # single-buffer constants

    # ---------------- Pass 1: per-edge messages (grid over edge tiles only).
    m = pl.pallas_call(
        _edge_msg_kernel,
        out_shape=jax.ShapeDtypeStruct((Ep, H), jnp.float32),
        grid_spec=pltpu.PrefetchScalarGridSpec(
            num_scalar_prefetch=0,
            grid=(Ep // te,),
            in_specs=[
                pl.BlockSpec((te, De), lambda k: (k, 0)),    # edge features
                pl.BlockSpec((te, H), lambda k: (k, 0)),     # pre-gathered h[src]
                _const(w1.shape),
                _const(b1.shape),
                _const(w2p.shape),
                _const(b2p.shape),
                _const(S.shape),
            ],
            out_specs=pl.BlockSpec((te, H), lambda k: (k, 0)),
        ),
        compiler_params=pltpu.CompilerParams(
            dimension_semantics=("parallel",)),
    )(ef_p, hsrc, w1, b1, w2p, b2p, S)

    # ---------------- Pass 2: scatter-sum + residual + bias.
    out = pl.pallas_call(
        _scatter_kernel,
        out_shape=jax.ShapeDtypeStruct((Np, H), jnp.float32),
        grid_spec=pltpu.PrefetchScalarGridSpec(
            num_scalar_prefetch=0,
            grid=(Np // tn, Ep // te),
            in_specs=[
                pl.BlockSpec((tn, te), lambda n, k: (n, k)),   # scatter one-hot^T tile
                pl.BlockSpec((te, H), lambda n, k: (k, 0)),    # messages tile
                pl.BlockSpec((tn, H), lambda n, k: (n, 0)),    # node tile (residual)
                _const(bias.shape),                            # bias (constant)
            ],
            out_specs=pl.BlockSpec((tn, H), lambda n, k: (n, 0)),  # accumulator
        ),
        compiler_params=pltpu.CompilerParams(
            dimension_semantics=("parallel", "arbitrary")),
    )(gdstT, m, nf_p, bias)

    return out[:N]


def reference(nf, ef, src, dst, params):
    """Pure-JAX reference mirroring DGL NNConv('sum', residual=True)."""
    w1, b1, w2, b2, bias = params
    N, H = nf.shape
    E = ef.shape[0]
    wflat = jax.nn.relu(ef @ w1 + b1) @ w2 + b2
    W = wflat.reshape(E, H, H)
    m = jnp.einsum('ei,eio->eo', nf[src], W)
    agg = jnp.zeros((N, H), jnp.float32).at[dst].add(m)
    return agg + nf + bias


if __name__ == "__main__":
    # nodes, edges, hid_dim, edge-feat dim, edge-MLP hidden; edge tile, node tile
    N, E, H, De, Hm = 64, 256, 32, 8, 32
    TE, TN = 128, 128

    key = jax.random.PRNGKey(0)
    ks = jax.random.split(key, 8)

    nf = jax.random.normal(ks[0], (N, H), jnp.float32)
    ef = jax.random.normal(ks[1], (E, De), jnp.float32)
    src = jax.random.randint(ks[2], (E,), 0, N, dtype=jnp.int32)
    dst = jax.random.randint(ks[3], (E,), 0, N, dtype=jnp.int32)

    # edge_func = Linear(De,Hm) -> ReLU -> Linear(Hm, H*H); NNConv bias = zeros.
    w1 = jax.random.normal(ks[4], (De, Hm), jnp.float32) / np.sqrt(De)
    b1 = jax.random.normal(ks[5], (1, Hm), jnp.float32) * 0.1
    w2 = jax.random.normal(ks[6], (Hm, H * H), jnp.float32) / np.sqrt(Hm)
    b2 = jax.random.normal(ks[7], (1, H * H), jnp.float32) * 0.1
    bias = jnp.zeros((1, H), jnp.float32)
    params = (w1, b1, w2, b2, bias)

    out = dgl_mpnn_layer(nf, ef, src, dst, params, te=TE, tn=TN)
    out = jax.block_until_ready(out)

    ref = reference(nf, ef, src, dst, params)
    err = float(np.max(np.abs(np.asarray(out) - np.asarray(ref))))
    assert np.allclose(np.asarray(out), np.asarray(ref), rtol=2e-2, atol=2e-2), (
        "max abs err = %g" % err)
    print("KERNEL_OK")
</pallas_src>

<mosaic_0001>
module attributes {stable_mosaic.version = 11 : i64} {
  func.func @_edge_msg_kernel(%arg0: i32, %arg1: memref<128x8xf32, #tpu.memory_space<vmem>>, %arg2: memref<128x32xf32, #tpu.memory_space<vmem>>, %arg3: memref<8x32xf32, #tpu.memory_space<vmem>>, %arg4: memref<1x32xf32, #tpu.memory_space<vmem>>, %arg5: memref<32x1024xf32, #tpu.memory_space<vmem>>, %arg6: memref<1x1024xf32, #tpu.memory_space<vmem>>, %arg7: memref<1024x32xf32, #tpu.memory_space<vmem>>, %arg8: memref<128x32xf32, #tpu.memory_space<vmem>>) attributes {dimension_semantics = [#tpu.dimension_semantics<parallel>], iteration_bounds = array<i64: 2>, scalar_prefetch = 0 : i64, scratch_operands = 0 : i64, tpu.core_type = #tpu.core_type<tc>, window_params = [{transform_indices = @transform_0, window_bounds = array<i64: 128, 8>}, {transform_indices = @transform_1, window_bounds = array<i64: 128, 32>}, {pipeline_mode = #tpu.pipeline_mode<synchronous>, transform_indices = @transform_2, window_bounds = array<i64: 8, 32>}, {pipeline_mode = #tpu.pipeline_mode<synchronous>, transform_indices = @transform_3, window_bounds = array<i64: 1, 32>}, {pipeline_mode = #tpu.pipeline_mode<synchronous>, transform_indices = @transform_4, window_bounds = array<i64: 32, 1024>}, {pipeline_mode = #tpu.pipeline_mode<synchronous>, transform_indices = @transform_5, window_bounds = array<i64: 1, 1024>}, {pipeline_mode = #tpu.pipeline_mode<synchronous>, transform_indices = @transform_6, window_bounds = array<i64: 1024, 32>}, {transform_indices = @transform_7, window_bounds = array<i64: 128, 32>}]} {
    %c0 = arith.constant 0 : index
    %c0_0 = arith.constant 0 : index
    %0 = vector.load %arg1[%c0, %c0_0] : memref<128x8xf32, #tpu.memory_space<vmem>>, vector<128x8xf32>
    %c0_1 = arith.constant 0 : index
    %c0_2 = arith.constant 0 : index
    %1 = vector.load %arg3[%c0_1, %c0_2] : memref<8x32xf32, #tpu.memory_space<vmem>>, vector<8x32xf32>
    %cst = arith.constant dense<0.000000e+00> : vector<128x32xf32>
    %2 = tpu.matmul %0, %1, %cst {dimension_numbers = #tpu.dot_dimension_numbers<[1], [0], [0], [1], [0, 0, 1, 1], [], []>} : vector<128x8xf32>, vector<8x32xf32>, vector<128x32xf32> -> vector<128x32xf32>
    %c0_3 = arith.constant 0 : index
    %c0_4 = arith.constant 0 : index
    %3 = vector.load %arg4[%c0_3, %c0_4] : memref<1x32xf32, #tpu.memory_space<vmem>>, vector<1x32xf32>
    %4 = vector.broadcast %3 : vector<1x32xf32> to vector<128x32xf32>
    %5 = arith.addf %2, %4 : vector<128x32xf32>
    %cst_5 = arith.constant 0.000000e+00 : f32
    %6 = vector.broadcast %cst_5 : f32 to vector<128x32xf32>
    %7 = arith.maximumf %5, %6 : vector<128x32xf32>
    %c0_6 = arith.constant 0 : index
    %c0_7 = arith.constant 0 : index
    %8 = vector.load %arg5[%c0_6, %c0_7] : memref<32x1024xf32, #tpu.memory_space<vmem>>, vector<32x1024xf32>
    %cst_8 = arith.constant dense<0.000000e+00> : vector<128x1024xf32>
    %9 = tpu.matmul %7, %8, %cst_8 {dimension_numbers = #tpu.dot_dimension_numbers<[1], [0], [0], [1], [0, 0, 1, 1], [], []>} : vector<128x32xf32>, vector<32x1024xf32>, vector<128x1024xf32> -> vector<128x1024xf32>
    %c0_9 = arith.constant 0 : index
    %c0_10 = arith.constant 0 : index
    %10 = vector.load %arg6[%c0_9, %c0_10] : memref<1x1024xf32, #tpu.memory_space<vmem>>, vector<1x1024xf32>
    %11 = vector.broadcast %10 : vector<1x1024xf32> to vector<128x1024xf32>
    %12 = arith.addf %9, %11 : vector<128x1024xf32>
    %c0_11 = arith.constant 0 : index
    %c0_12 = arith.constant 0 : index
    %13 = vector.load %arg2[%c0_11, %c0_12] : memref<128x32xf32, #tpu.memory_space<vmem>>, vector<128x32xf32>
    %14 = tpu.concatenate %13, %13, %13, %13, %13, %13, %13, %13, %13, %13, %13, %13, %13, %13, %13, %13 in 1 : vector<128x32xf32>, vector<128x32xf32>, vector<128x32xf32>, vector<128x32xf32>, vector<128x32xf32>, vector<128x32xf32>, vector<128x32xf32>, vector<128x32xf32>, vector<128x32xf32>, vector<128x32xf32>, vector<128x32xf32>, vector<128x32xf32>, vector<128x32xf32>, vector<128x32xf32>, vector<128x32xf32>, vector<128x32xf32> -> vector<128x512xf32>
    %15 = tpu.concatenate %13, %13, %13, %13, %13, %13, %13, %13, %13, %13, %13, %13, %13, %13, %13, %13 in 1 : vector<128x32xf32>, vector<128x32xf32>, vector<128x32xf32>, vector<128x32xf32>, vector<128x32xf32>, vector<128x32xf32>, vector<128x32xf32>, vector<128x32xf32>, vector<128x32xf32>, vector<128x32xf32>, vector<128x32xf32>, vector<128x32xf32>, vector<128x32xf32>, vector<128x32xf32>, vector<128x32xf32>, vector<128x32xf32> -> vector<128x512xf32>
    %16 = tpu.concatenate %14, %15 in 1 : vector<128x512xf32>, vector<128x512xf32> -> vector<128x1024xf32>
    %17 = arith.mulf %16, %12 : vector<128x1024xf32>
    %c0_13 = arith.constant 0 : index
    %c0_14 = arith.constant 0 : index
    %18 = vector.load %arg7[%c0_13, %c0_14] : memref<1024x32xf32, #tpu.memory_space<vmem>>, vector<1024x32xf32>
    %cst_15 = arith.constant dense<0.000000e+00> : vector<128x32xf32>
    %19 = tpu.matmul %17, %18, %cst_15 {dimension_numbers = #tpu.dot_dimension_numbers<[1], [0], [0], [1], [0, 0, 1, 1], [], []>} : vector<128x1024xf32>, vector<1024x32xf32>, vector<128x32xf32> -> vector<128x32xf32>
    %c0_16 = arith.constant 0 : index
    %c0_17 = arith.constant 0 : index
    %20 = vector.load %arg8[%c0_16, %c0_17] : memref<128x32xf32, #tpu.memory_space<vmem>>, vector<128x32xf32>
    tpu.vector_store %arg8[%c0_16, %c0_17], %19 {strides = array<i32>} : memref<128x32xf32, #tpu.memory_space<vmem>>, vector<128x32xf32>,
    return
  }
  func.func @transform_0(%arg0: i32) -> (i32, i32) {
    %c0_i32 = arith.constant 0 : i32
    %c0_i32_0 = arith.constant 0 : i32
    return %arg0, %c0_i32 : i32, i32
  }
  func.func @transform_1(%arg0: i32) -> (i32, i32) {
    %c0_i32 = arith.constant 0 : i32
    %c0_i32_0 = arith.constant 0 : i32
    return %arg0, %c0_i32 : i32, i32
  }
  func.func @transform_2(%arg0: i32) -> (i32, i32) {
    %c0_i32 = arith.constant 0 : i32
    %c0_i32_0 = arith.constant 0 : i32
    %c0_i32_1 = arith.constant 0 : i32
    return %c0_i32, %c0_i32_0 : i32, i32
  }
  func.func @transform_3(%arg0: i32) -> (i32, i32) {
    %c0_i32 = arith.constant 0 : i32
    %c0_i32_0 = arith.constant 0 : i32
    %c0_i32_1 = arith.constant 0 : i32
    return %c0_i32, %c0_i32_0 : i32, i32
  }
  func.func @transform_4(%arg0: i32) -> (i32, i32) {
    %c0_i32 = arith.constant 0 : i32
    %c0_i32_0 = arith.constant 0 : i32
    %c0_i32_1 = arith.constant 0 : i32
    return %c0_i32, %c0_i32_0 : i32, i32
  }
  func.func @transform_5(%arg0: i32) -> (i32, i32) {
    %c0_i32 = arith.constant 0 : i32
    %c0_i32_0 = arith.constant 0 : i32
    %c0_i32_1 = arith.constant 0 : i32
    return %c0_i32, %c0_i32_0 : i32, i32
  }
  func.func @transform_6(%arg0: i32) -> (i32, i32) {
    %c0_i32 = arith.constant 0 : i32
    %c0_i32_0 = arith.constant 0 : i32
    %c0_i32_1 = arith.constant 0 : i32
    return %c0_i32, %c0_i32_0 : i32, i32
  }
  func.func @transform_7(%arg0: i32) -> (i32, i32) {
    %c0_i32 = arith.constant 0 : i32
    %c0_i32_0 = arith.constant 0 : i32
    return %arg0, %c0_i32 : i32, i32
  }
}

</mosaic_0001>

<llo_original>
// kernel: tpu_custom_call.1
$region0: #{tpu_custom_call.1}
  #allocation0 [shape = 'u32[]', space=smem, size = 0x4, offset = 0x4, fixed_abs, tag = 'smem constant byte address 0x4 - core index']
  #allocation1 [shape = 'u32[144,128]{1,0:T(1,128)}', space=vmem, size = 0x12000, scoped, tag = 'internal scratch']
  %s0 = inlined_call_operand.vmem [shape: f32[256,8], index: 0, kind: input, shape index: {}]
  %s1 = inlined_call_operand.vmem [shape: f32[256,32], index: 1, kind: input, shape index: {}]
  %s2 = inlined_call_operand.vmem [shape: f32[8,32], index: 2, kind: input, shape index: {}]
  %s3 = inlined_call_operand.vmem [shape: f32[1,32], index: 3, kind: input, shape index: {}]
  %s4 = inlined_call_operand.vmem [shape: f32[32,1024], index: 4, kind: input, shape index: {}]
  %s5 = inlined_call_operand.vmem [shape: f32[1,1024], index: 5, kind: input, shape index: {}]
  %s6 = inlined_call_operand.vmem [shape: f32[1024,32], index: 6, kind: input, shape index: {}]
  %s7 = inlined_call_operand.vmem [shape: f32[256,32], index: 7, kind: output, shape index: {}]
  %s8 = sld [smem:[#allocation0]]
  $region61: #{tpu_custom_call.1} parent=0
    _
  %s10 = ssub.s32 1, %s8
  %s11 = scalar_select 0, %s10, %s8
  loop: start=0, step=1, limit=4
  $region2: #{tpu_custom_call.1} parent=0 // loop_pre_header
    _
  $region3: #{tpu_custom_call.1} parent=0 // loop_header
    %s13 = sphi 0, %s17
    %p14 = scmp.ge.s32.totalorder %s13, 4
    %s23 = sphi 0, %s25
    %s26 = sphi 0, %s23
    %s27 = sphi 0, %s26
    %s43 = sphi 0, %s27
    %s49 = sphi 0, %s51
    %s52 = sphi 0, %s49
    %s53 = sphi 0, %s52
    %s69 = sphi 0, %s53
    %s73 = sphi 0, %s73
    %s75 = sphi 0, %s73
    %s76 = sphi 0, %s75
    %s90 = sphi 0, %s76
    %s94 = sphi 0, %s94
    %s96 = sphi 0, %s94
    %s97 = sphi 0, %s96
    %s111 = sphi 0, %s97
    %s115 = sphi 0, %s115
    %s117 = sphi 0, %s115
    %s118 = sphi 0, %s117
    %s132 = sphi 0, %s118
    %s136 = sphi 0, %s136
    %s138 = sphi 0, %s136
    %s139 = sphi 0, %s138
    %s153 = sphi 0, %s139
    %s157 = sphi 0, %s157
    %s159 = sphi 0, %s157
    %s160 = sphi 0, %s159
    %s174 = sphi 0, %s160
    %s180 = sphi 0, %s182
    %s183 = sphi 0, %s180
    %s184 = sphi 0, %s183
    %s200 = sphi 0, %s184
  $region4: #{tpu_custom_call.1} parent=0 // loop_header_branch
    %16 = sbr.rel (%p14) target = $region8
  $region5: #{tpu_custom_call.1} parent=0 // loop_body
    %s18 = ssub.s32 %s13, 1
    %s19 = ssub.s32 %s13, 2
    %s20 = sadd.s32 %s13, 1
    %s21 = ssub.s32 %s13, %s20
    %p22 = scmp.eq.s32.totalorder %s21, 0
    %s24 = sadd.s32 %s23, 1
    %s25 = scalar_select %p22, %s23, %s24
    %p28 = pneg %p22
    %p29 = scmp.eq.s32.totalorder %s13, 1
    %p30 = por %p28, %p29
    %p31 = scmp.ne.s32.totalorder %s23, %s26
    %p32 = scmp.eq.s32.totalorder %s13, 0
    %p33 = por %p31, %p32
    %p34 = scmp.ne.s32.totalorder %s23, %s26
    %p35 = scmp.eq.s32.totalorder %s18, 1
    %p36 = por %p34, %p35
    %p37 = scmp.ne.s32.totalorder %s26, %s27
    %p38 = scmp.eq.s32.totalorder %s18, 0
    %p39 = por %p37, %p38
    %p40 = scmp.ne.s32.totalorder %s26, %s27
    %p41 = scmp.eq.s32.totalorder %s19, 1
    %p42 = por %p40, %p41
    %p44 = scmp.ne.s32.totalorder %s27, %s43
    %p45 = scmp.eq.s32.totalorder %s19, 0
    %p46 = por %p44, %p45
    %s47 = ssub.s32 %s13, %s20
    %p48 = scmp.eq.s32.totalorder %s47, 0
    %s50 = sadd.s32 %s49, 1
    %s51 = scalar_select %p48, %s49, %s50
    %p54 = pneg %p48
    %p55 = scmp.eq.s32.totalorder %s13, 1
    %p56 = por %p54, %p55
    %p57 = scmp.ne.s32.totalorder %s49, %s52
    %p58 = scmp.eq.s32.totalorder %s13, 0
    %p59 = por %p57, %p58
    %p60 = scmp.ne.s32.totalorder %s49, %s52
    %p61 = scmp.eq.s32.totalorder %s18, 1
    %p62 = por %p60, %p61
    %p63 = scmp.ne.s32.totalorder %s52, %s53
    %p64 = scmp.eq.s32.totalorder %s18, 0
    %p65 = por %p63, %p64
    %p66 = scmp.ne.s32.totalorder %s52, %s53
    %p67 = scmp.eq.s32.totalorder %s19, 1
    %p68 = por %p66, %p67
    %p70 = scmp.ne.s32.totalorder %s53, %s69
    %p71 = scmp.eq.s32.totalorder %s19, 0
    %p72 = por %p70, %p71
    %s74 = sadd.s32 %s73, 1
    %p77 = scmp.eq.s32.totalorder %s13, 1
    %p78 = scmp.ne.s32.totalorder %s73, %s75
    %p79 = scmp.eq.s32.totalorder %s13, 0
    %p80 = por %p78, %p79
    %p81 = scmp.ne.s32.totalorder %s73, %s75
    %p82 = scmp.eq.s32.totalorder %s18, 1
    %p83 = por %p81, %p82
    %p84 = scmp.ne.s32.totalorder %s75, %s76
    %p85 = scmp.eq.s32.totalorder %s18, 0
    %p86 = por %p84, %p85
    %p87 = scmp.ne.s32.totalorder %s75, %s76
    %p88 = scmp.eq.s32.totalorder %s19, 1
    %p89 = por %p87, %p88
    %p91 = scmp.ne.s32.totalorder %s76, %s90
    %p92 = scmp.eq.s32.totalorder %s19, 0
    %p93 = por %p91, %p92
    %s95 = sadd.s32 %s94, 1
    %p98 = scmp.eq.s32.totalorder %s13, 1
    %p99 = scmp.ne.s32.totalorder %s94, %s96
    %p100 = scmp.eq.s32.totalorder %s13, 0
    %p101 = por %p99, %p100
    %p102 = scmp.ne.s32.totalorder %s94, %s96
    %p103 = scmp.eq.s32.totalorder %s18, 1
    %p104 = por %p102, %p103
    %p105 = scmp.ne.s32.totalorder %s96, %s97
    %p106 = scmp.eq.s32.totalorder %s18, 0
    %p107 = por %p105, %p106
    %p108 = scmp.ne.s32.totalorder %s96, %s97
    %p109 = scmp.eq.s32.totalorder %s19, 1
    %p110 = por %p108, %p109
    %p112 = scmp.ne.s32.totalorder %s97, %s111
    %p113 = scmp.eq.s32.totalorder %s19, 0
    %p114 = por %p112, %p113
    %s116 = sadd.s32 %s115, 1
    %p119 = scmp.eq.s32.totalorder %s13, 1
    %p120 = scmp.ne.s32.totalorder %s115, %s117
    %p121 = scmp.eq.s32.totalorder %s13, 0
    %p122 = por %p120, %p121
    %p123 = scmp.ne.s32.totalorder %s115, %s117
    %p124 = scmp.eq.s32.totalorder %s18, 1
    %p125 = por %p123, %p124
    %p126 = scmp.ne.s32.totalorder %s117, %s118
    %p127 = scmp.eq.s32.totalorder %s18, 0
    %p128 = por %p126, %p127
    %p129 = scmp.ne.s32.totalorder %s117, %s118
    %p130 = scmp.eq.s32.totalorder %s19, 1
    %p131 = por %p129, %p130
    %p133 = scmp.ne.s32.totalorder %s118, %s132
    %p134 = scmp.eq.s32.totalorder %s19, 0
    %p135 = por %p133, %p134
    %s137 = sadd.s32 %s136, 1
    %p140 = scmp.eq.s32.totalorder %s13, 1
    %p141 = scmp.ne.s32.totalorder %s136, %s138
    %p142 = scmp.eq.s32.totalorder %s13, 0
    %p143 = por %p141, %p142
    %p144 = scmp.ne.s32.totalorder %s136, %s138
    %p145 = scmp.eq.s32.totalorder %s18, 1
    %p146 = por %p144, %p145
    %p147 = scmp.ne.s32.totalorder %s138, %s139
    %p148 = scmp.eq.s32.totalorder %s18, 0
    %p149 = por %p147, %p148
    %p150 = scmp.ne.s32.totalorder %s138, %s139
    %p151 = scmp.eq.s32.totalorder %s19, 1
    %p152 = por %p150, %p151
    %p154 = scmp.ne.s32.totalorder %s139, %s153
    %p155 = scmp.eq.s32.totalorder %s19, 0
    %p156 = por %p154, %p155
    %s158 = sadd.s32 %s157, 1
    %p161 = scmp.eq.s32.totalorder %s13, 1
    %p162 = scmp.ne.s32.totalorder %s157, %s159
    %p163 = scmp.eq.s32.totalorder %s13, 0
    %p164 = por %p162, %p163
    %p165 = scmp.ne.s32.totalorder %s157, %s159
    %p166 = scmp.eq.s32.totalorder %s18, 1
    %p167 = por %p165, %p166
    %p168 = scmp.ne.s32.totalorder %s159, %s160
    %p169 = scmp.eq.s32.totalorder %s18, 0
    %p170 = por %p168, %p169
    %p171 = scmp.ne.s32.totalorder %s159, %s160
    %p172 = scmp.eq.s32.totalorder %s19, 1
    %p173 = por %p171, %p172
    %p175 = scmp.ne.s32.totalorder %s160, %s174
    %p176 = scmp.eq.s32.totalorder %s19, 0
    %p177 = por %p175, %p176
    %s178 = ssub.s32 %s13, %s20
    %p179 = scmp.eq.s32.totalorder %s178, 0
    %s181 = sadd.s32 %s180, 1
    %s182 = scalar_select %p179, %s180, %s181
    %p185 = pneg %p179
    %p186 = scmp.eq.s32.totalorder %s13, 1
    %p187 = por %p185, %p186
    %p188 = scmp.ne.s32.totalorder %s180, %s183
    %p189 = scmp.eq.s32.totalorder %s13, 0
    %p190 = por %p188, %p189
    %p191 = scmp.ne.s32.totalorder %s180, %s183
    %p192 = scmp.eq.s32.totalorder %s18, 1
    %p193 = por %p191, %p192
    %p194 = scmp.ne.s32.totalorder %s183, %s184
    %p195 = scmp.eq.s32.totalorder %s18, 0
    %p196 = por %p194, %p195
    %p197 = scmp.ne.s32.totalorder %s183, %s184
    %p198 = scmp.eq.s32.totalorder %s19, 1
    %p199 = por %p197, %p198
    %p201 = scmp.ne.s32.totalorder %s184, %s200
    %p202 = scmp.eq.s32.totalorder %s19, 0
    %p203 = por %p201, %p202
    %p204 = scmp.le.s32.totalorder 1, %s13
    %p205 = scmp.lt.s32.totalorder %s13, 3
    %p206 = pnand %p204, %p205
    %p207 = pneg %p206
    // Predicated region
    $region9: #{tpu_custom_call.1} parent=5 // pred_check
      _
    $region10: #{tpu_custom_call.1} parent=5 // pred_check_branch
      %209 = sbr.rel (%p206) target = $region12
    $region11: #{tpu_custom_call.1} parent=5 // pred_region
      %s210 = ssub.s32 %s13, 1
      // Predicated region
      $region13: #{tpu_custom_call.1} parent=11 // pred_check
        %p211 = pneg %p86
      $region14: #{tpu_custom_call.1} parent=11 // pred_check_branch
        %213 = sbr.rel (%p211) target = $region16
      $region15: #{tpu_custom_call.1} parent=11 // pred_region
        _
      $region16: #{tpu_custom_call.1} parent=11 // pred_fallthru
        _
      // Predicated region
      $region17: #{tpu_custom_call.1} parent=11 // pred_check
        %p214 = pneg %p107
      $region18: #{tpu_custom_call.1} parent=11 // pred_check_branch
        %216 = sbr.rel (%p214) target = $region20
      $region19: #{tpu_custom_call.1} parent=11 // pred_region
        _
      $region20: #{tpu_custom_call.1} parent=11 // pred_fallthru
        _
      // Predicated region
      $region21: #{tpu_custom_call.1} parent=11 // pred_check
        %p217 = pneg %p128
      $region22: #{tpu_custom_call.1} parent=11 // pred_check_branch
        %219 = sbr.rel (%p217) target = $region24
      $region23: #{tpu_custom_call.1} parent=11 // pred_region
        _
      $region24: #{tpu_custom_call.1} parent=11 // pred_fallthru
        _
      // Predicated region
      $region25: #{tpu_custom_call.1} parent=11 // pred_check
        %p220 = pneg %p149
      $region26: #{tpu_custom_call.1} parent=11 // pred_check_branch
        %222 = sbr.rel (%p220) target = $region28
      $region27: #{tpu_custom_call.1} parent=11 // pred_region
        _
      $region28: #{tpu_custom_call.1} parent=11 // pred_fallthru
        _
      // Predicated region
      $region29: #{tpu_custom_call.1} parent=11 // pred_check
        %p223 = pneg %p170
      $region30: #{tpu_custom_call.1} parent=11 // pred_check_branch
        %225 = sbr.rel (%p223) target = $region32
      $region31: #{tpu_custom_call.1} parent=11 // pred_region
        _
      $region32: #{tpu_custom_call.1} parent=11 // pred_fallthru
        _
    $region12: #{tpu_custom_call.1} parent=5 // pred_fallthru
      _
    %p226 = scmp.lt.s32.totalorder %s13, 2
    // Predicated region
    $region33: #{tpu_custom_call.1} parent=5 // pred_check
      %p227 = pneg %p226
    $region34: #{tpu_custom_call.1} parent=5 // pred_check_branch
      %229 = sbr.rel (%p227) target = $region36
    $region35: #{tpu_custom_call.1} parent=5 // pred_region
      // Predicated region
      $region37: #{tpu_custom_call.1} parent=35 // pred_check
        %p230 = pneg %p33
      $region38: #{tpu_custom_call.1} parent=35 // pred_check_branch
        %232 = sbr.rel (%p230) target = $region40
      $region39: #{tpu_custom_call.1} parent=35 // pred_region
        %s233 = smul.u32 16, %s13
        %p234 = scmp.lt.s32.totalorder %s233, 31
        %s235 = scalar_select %p234, %s233, 31
        %s236 = smul.addr %s235, 8
        %s237 = scalar_lea.vmem %s0, %s236
        %s238 = smul.u32 16, %s13
      $region40: #{tpu_custom_call.1} parent=35 // pred_fallthru
        _
      // Predicated region
      $region41: #{tpu_custom_call.1} parent=35 // pred_check
        %p239 = pneg %p59
      $region42: #{tpu_custom_call.1} parent=35 // pred_check_branch
        %241 = sbr.rel (%p239) target = $region44
      $region43: #{tpu_custom_call.1} parent=35 // pred_region
        %s242 = smul.u32 16, %s13
        %p243 = scmp.lt.s32.totalorder %s242, 31
        %s244 = scalar_select %p243, %s242, 31
        %s245 = smul.addr %s244, 8
        %s246 = scalar_lea.vmem %s1, %s245
        %s247 = smul.u32 16, %s13
      $region44: #{tpu_custom_call.1} parent=35 // pred_fallthru
        _
    $region36: #{tpu_custom_call.1} parent=5 // pred_fallthru
      _
    %p248 = scmp.le.s32.totalorder 1, %s13
    %p249 = scmp.lt.s32.totalorder %s13, 3
    %p250 = pnand %p248, %p249
    %p251 = pneg %p250
    // Predicated region
    $region45: #{tpu_custom_call.1} parent=5 // pred_check
      _
    $region46: #{tpu_custom_call.1} parent=5 // pred_check_branch
      %253 = sbr.rel (%p250) target = $region48
    $region47: #{tpu_custom_call.1} parent=5 // pred_region
      %s254 = ssub.s32 %s13, 1
      %s255 = smul.u32 16, %s18
      %p256 = scmp.lt.s32.totalorder %s255, 31
      %s257 = scalar_select %p256, %s255, 31
      %s258 = smul.addr %s257, 8
      %s259 = scalar_lea.vmem %s0, %s258
      %p260 = pneg %p39
      %p261 = pneg %p36
      %s262 = smul.u32 16, %s18
      %p263 = scmp.lt.s32.totalorder %s262, 31
      %s264 = scalar_select %p263, %s262, 31
      %s265 = smul.addr %s264, 8
      %s266 = scalar_lea.vmem %s1, %s265
      %p267 = pneg %p65
      %p268 = pneg %p62
      %p269 = pneg %p86
      %p270 = pneg %p83
      %p271 = pneg %p107
      %p272 = pneg %p104
      %p273 = pneg %p128
      %p274 = pneg %p125
      %p275 = pneg %p149
      %p276 = pneg %p146
      %p277 = pneg %p170
      %p278 = pneg %p167
      %p279 = pneg %p196
      %p280 = pneg %p193
      %s281 = smul.u32 16, %s18
      %p282 = scmp.lt.s32.totalorder %s281, 31
      %s283 = scalar_select %p282, %s281, 31
      %s284 = smul.addr %s283, 8
      %s285 = scalar_lea.vmem %s7, %s284
      %s286 = smul.u32 16, %s18
      %p287 = scmp.lt.s32.totalorder %s286, 31
      %s288 = scalar_select %p287, %s286, 31
      %s289 = smul.addr %s288, 8
      %s290 = scalar_lea.vmem %s0, %s289
      %s291 = smul.u32 16, %s18
      %s292 = smul.u32 16, %s18
      %p293 = scmp.lt.s32.totalorder %s292, 31
      %s294 = scalar_select %p293, %s292, 31
      %s295 = smul.addr %s294, 8
      %s296 = scalar_lea.vmem %s1, %s295
      %s297 = smul.u32 16, %s18
      %s298 = smul.u32 16, %s18
      %p299 = scmp.lt.s32.totalorder %s298, 31
      %s300 = scalar_select %p299, %s298, 31
      %s301 = smul.addr %s300, 8
      %s302 = scalar_lea.vmem %s7, %s301
      %s303 = smul.u32 16, %s18
      %v304 = vld [vmem:[%s290] sm:$0xff]
      %v305 = vld [vmem:[%s290 + $0x8] sm:$0xff]
      %v306 = vld [vmem:[%s290 + $0x10] sm:$0xff]
      %v307 = vld [vmem:[%s290 + $0x18] sm:$0xff]
      %v308 = vld [vmem:[%s290 + $0x20] sm:$0xff]
      %v309 = vld [vmem:[%s290 + $0x28] sm:$0xff]
      %v310 = vld [vmem:[%s290 + $0x30] sm:$0xff]
      %v311 = vld [vmem:[%s290 + $0x38] sm:$0xff]
      %v312 = vld [vmem:[%s290 + $0x40] sm:$0xff]
      %v313 = vld [vmem:[%s290 + $0x48] sm:$0xff]
      %v314 = vld [vmem:[%s290 + $0x50] sm:$0xff]
      %v315 = vld [vmem:[%s290 + $0x58] sm:$0xff]
      %v316 = vld [vmem:[%s290 + $0x60] sm:$0xff]
      %v317 = vld [vmem:[%s290 + $0x68] sm:$0xff]
      %v318 = vld [vmem:[%s290 + $0x70] sm:$0xff]
      %v319 = vld [vmem:[%s290 + $0x78] sm:$0xff]
      %v320 = vld [vmem:[%s2] sm:$0xff]
      %v321 = vld [vmem:[%s3] sm:$0x1]
      %v323 = vlaneseq
      %v324 = vshrl.u32 %v323, 7
      %v325 = vsub.s32 0, %v324
      %v326 = vrot.slane %v321, %v325
      %vm328 = vcmask 64512
      %v330 = vsel %vm328, %v304, 0
      %v333 = vsel %vm328, %v305, 0
      %v336 = vsel %vm328, %v306, 0
      %v339 = vsel %vm328, %v307, 0
      %v342 = vsel %vm328, %v308, 0
      %v345 = vsel %vm328, %v309, 0
      %v348 = vsel %vm328, %v310, 0
      %v351 = vsel %vm328, %v311, 0
      %v354 = vsel %vm328, %v312, 0
      %v357 = vsel %vm328, %v313, 0
      %v360 = vsel %vm328, %v314, 0
      %v363 = vsel %vm328, %v315, 0
      %v366 = vsel %vm328, %v316, 0
      %v369 = vsel %vm328, %v317, 0
      %v372 = vsel %vm328, %v318, 0
      %v375 = vsel %vm328, %v319, 0
      %377 = vmatprep.subr.mxu0 0.0
      %378 = vmatpush1.msra.mxu0 0.0
      %379 = vmatprep.subr.mxu0 0.0
      %380 = vmatpush1.msra.mxu0 0.0
      %381 = vmatprep.subr.mxu0 0.0
      %382 = vmatpush1.msra.mxu0 0.0
      %383 = vmatprep.subr.mxu0 0.0
      %384 = vmatpush1.msra.mxu0 0.0
      %385 = vmatprep.subr.mxu0 0.0
      %386 = vmatpush1.msra.mxu0 0.0
      %387 = vmatprep.subr.mxu0 0.0
      %388 = vmatpush1.msra.mxu0 0.0
      %389 = vmatprep.subr.mxu0 0.0
      %390 = vmatpush1.msra.mxu0 0.0
      %391 = vmatprep.subr.mxu0 0.0
      %392 = vmatpush1.msra.mxu0 0.0
      %393 = vmatprep.subr.mxu0 0.0
      %394 = vmatpush1.msra.mxu0 0.0
      %395 = vmatprep.subr.mxu0 0.0
      %396 = vmatpush1.msra.mxu0 0.0
      %397 = vmatprep.subr.mxu0 0.0
      %398 = vmatpush1.msra.mxu0 0.0
      %399 = vmatprep.subr.mxu0 0.0
      %400 = vmatpush1.msra.mxu0 0.0
      %401 = vmatprep.subr.mxu0 0.0
      %402 = vmatpush1.msra.mxu0 0.0
      %403 = vmatprep.subr.mxu0 0.0
      %404 = vmatpush1.msra.mxu0 0.0
      %405 = vmatprep.subr.mxu0 0.0
      %406 = vmatpush1.msra.mxu0 0.0
      %407 = vmatprep.subr.mxu0 0.0
      %408 = vmatpush1.msra.mxu0 %v320
      %409 = vmatprep.subr.mxu0 0.0
      %410 = vmatpush2.msra.mxu0 0.0
      %411 = vmatprep.subr.mxu0 0.0
      %412 = vmatpush2.msra.mxu0 0.0
      %413 = vmatprep.subr.mxu0 0.0
      %414 = vmatpush2.msra.mxu0 0.0
      %415 = vmatprep.subr.mxu0 0.0
      %416 = vmatpush2.msra.mxu0 0.0
      %417 = vmatprep.subr.mxu0 0.0
      %418 = vmatpush2.msra.mxu0 0.0
      %419 = vmatprep.subr.mxu0 0.0
      %420 = vmatpush2.msra.mxu0 0.0
      %421 = vmatprep.subr.mxu0 0.0
      %422 = vmatpush2.msra.mxu0 0.0
      %423 = vmatprep.subr.mxu0 0.0
      %424 = vmatpush2.msra.mxu0 0.0
      %425 = vmatprep.subr.mxu0 0.0
      %426 = vmatpush2.msra.mxu0 0.0
      %427 = vmatprep.subr.mxu0 0.0
      %428 = vmatpush2.msra.mxu0 0.0
      %429 = vmatprep.subr.mxu0 0.0
      %430 = vmatpush2.msra.mxu0 0.0
      %431 = vmatprep.subr.mxu0 0.0
      %432 = vmatpush2.msra.mxu0 0.0
      %433 = vmatprep.subr.mxu0 0.0
      %434 = vmatpush2.msra.mxu0 0.0
      %435 = vmatprep.subr.mxu0 0.0
      %436 = vmatpush2.msra.mxu0 0.0
      %437 = vmatprep.subr.mxu0 0.0
      %438 = vmatpush2.msra.mxu0 0.0
      %439 = vmatprep.subr.mxu0 0.0
      %440 = vmatpush2.msra.mxu0 0.0
      %441 = vmatprep.mubr.f32.mxu0 0.0
      %442 = vmatmul.mubr.f32.gmra.mxu0 %v330
      %v443 = vpop.f32.mrf.mxu0
      %v444 = vadd.f32 %v326, %v443
      %v445 = vpop.f32.mrf.mxu0
      %446 = vmatprep.mubr.f32.mxu0 0.0
      %447 = vmatmul.mubr.f32.gmra.mxu0 %v333
      %v448 = vpop.f32.mrf.mxu0
      %v449 = vadd.f32 %v326, %v448
      %v450 = vpop.f32.mrf.mxu0
      %451 = vmatprep.mubr.f32.mxu0 0.0
      %452 = vmatmul.mubr.f32.gmra.mxu0 %v336
      %v453 = vpop.f32.mrf.mxu0
      %v454 = vadd.f32 %v326, %v453
      %v455 = vpop.f32.mrf.mxu0
      %456 = vmatprep.mubr.f32.mxu0 0.0
      %457 = vmatmul.mubr.f32.gmra.mxu0 %v339
      %v458 = vpop.f32.mrf.mxu0
      %v459 = vadd.f32 %v326, %v458
      %v460 = vpop.f32.mrf.mxu0
      %461 = vmatprep.mubr.f32.mxu0 0.0
      %462 = vmatmul.mubr.f32.gmra.mxu0 %v342
      %v463 = vpop.f32.mrf.mxu0
      %v464 = vadd.f32 %v326, %v463
      %v465 = vpop.f32.mrf.mxu0
      %466 = vmatprep.mubr.f32.mxu0 0.0
      %467 = vmatmul.mubr.f32.gmra.mxu0 %v345
      %v468 = vpop.f32.mrf.mxu0
      %v469 = vadd.f32 %v326, %v468
      %v470 = vpop.f32.mrf.mxu0
      %471 = vmatprep.mubr.f32.mxu0 0.0
      %472 = vmatmul.mubr.f32.gmra.mxu0 %v348
      %v473 = vpop.f32.mrf.mxu0
      %v474 = vadd.f32 %v326, %v473
      %v475 = vpop.f32.mrf.mxu0
      %476 = vmatprep.mubr.f32.mxu0 0.0
      %477 = vmatmul.mubr.f32.gmra.mxu0 %v351
      %v478 = vpop.f32.mrf.mxu0
      %v479 = vadd.f32 %v326, %v478
      %v480 = vpop.f32.mrf.mxu0
      %481 = vmatprep.mubr.f32.mxu0 0.0
      %482 = vmatmul.mubr.f32.gmra.mxu0 %v354
      %v483 = vpop.f32.mrf.mxu0
      %v484 = vadd.f32 %v326, %v483
      %v485 = vpop.f32.mrf.mxu0
      %486 = vmatprep.mubr.f32.mxu0 0.0
      %487 = vmatmul.mubr.f32.gmra.mxu0 %v357
      %v488 = vpop.f32.mrf.mxu0
      %v489 = vadd.f32 %v326, %v488
      %v490 = vpop.f32.mrf.mxu0
      %491 = vmatprep.mubr.f32.mxu0 0.0
      %492 = vmatmul.mubr.f32.gmra.mxu0 %v360
      %v493 = vpop.f32.mrf.mxu0
      %v494 = vadd.f32 %v326, %v493
      %v495 = vpop.f32.mrf.mxu0
      %496 = vmatprep.mubr.f32.mxu0 0.0
      %497 = vmatmul.mubr.f32.gmra.mxu0 %v363
      %v498 = vpop.f32.mrf.mxu0
      %v499 = vadd.f32 %v326, %v498
      %v500 = vpop.f32.mrf.mxu0
      %501 = vmatprep.mubr.f32.mxu0 0.0
      %502 = vmatmul.mubr.f32.gmra.mxu0 %v366
      %v503 = vpop.f32.mrf.mxu0
      %v504 = vadd.f32 %v326, %v503
      %v505 = vpop.f32.mrf.mxu0
      %506 = vmatprep.mubr.f32.mxu0 0.0
      %507 = vmatmul.mubr.f32.gmra.mxu0 %v369
      %v508 = vpop.f32.mrf.mxu0
      %v509 = vadd.f32 %v326, %v508
      %v510 = vpop.f32.mrf.mxu0
      %511 = vmatprep.mubr.f32.mxu0 0.0
      %512 = vmatmul.mubr.f32.gmra.mxu0 %v372
      %v513 = vpop.f32.mrf.mxu0
      %v514 = vadd.f32 %v326, %v513
      %v515 = vpop.f32.mrf.mxu0
      %516 = vmatprep.mubr.f32.mxu0 0.0
      %517 = vmatmul.mubr.f32.gmra.mxu0 %v375
      %v518 = vpop.f32.mrf.mxu0
      %v519 = vadd.f32 %v326, %v518
      %v520 = vpop.f32.mrf.mxu0
      %521 = vdwg.mxu0
      %v522 = vmax.f32 %v444, 0.0
      %v523 = vmax.f32 %v449, 0.0
      %v524 = vmax.f32 %v454, 0.0
      %v525 = vmax.f32 %v459, 0.0
      %v526 = vmax.f32 %v464, 0.0
      %v527 = vmax.f32 %v469, 0.0
      %v528 = vmax.f32 %v474, 0.0
      %v529 = vmax.f32 %v479, 0.0
      %v530 = vmax.f32 %v484, 0.0
      %v531 = vmax.f32 %v489, 0.0
      %v532 = vmax.f32 %v494, 0.0
      %v533 = vmax.f32 %v499, 0.0
      %v534 = vmax.f32 %v504, 0.0
      %v535 = vmax.f32 %v509, 0.0
      %v536 = vmax.f32 %v514, 0.0
      %v537 = vmax.f32 %v519, 0.0
      %v538 = vld [vmem:[%s4] sm:$0xff]
      %v539 = vld [vmem:[%s4 + $0x8] sm:$0xff]
      %v540 = vld [vmem:[%s4 + $0x10] sm:$0xff]
      %v541 = vld [vmem:[%s4 + $0x18] sm:$0xff]
      %v542 = vld [vmem:[%s4 + $0x20] sm:$0xff]
      %v543 = vld [vmem:[%s4 + $0x28] sm:$0xff]
      %v544 = vld [vmem:[%s4 + $0x30] sm:$0xff]
      %v545 = vld [vmem:[%s4 + $0x38] sm:$0xff]
      %v546 = vld [vmem:[%s4 + $0x40] sm:$0xff]
      %v547 = vld [vmem:[%s4 + $0x48] sm:$0xff]
      %v548 = vld [vmem:[%s4 + $0x50] sm:$0xff]
      %v549 = vld [vmem:[%s4 + $0x58] sm:$0xff]
      %v550 = vld [vmem:[%s4 + $0x60] sm:$0xff]
      %v551 = vld [vmem:[%s4 + $0x68] sm:$0xff]
      %v552 = vld [vmem:[%s4 + $0x70] sm:$0xff]
      %v553 = vld [vmem:[%s4 + $0x78] sm:$0xff]
      %v554 = vld [vmem:[%s4 + $0x80] sm:$0xff]
      %v555 = vld [vmem:[%s4 + $0x88] sm:$0xff]
      %v556 = vld [vmem:[%s4 + $0x90] sm:$0xff]
      %v557 = vld [vmem:[%s4 + $0x98] sm:$0xff]
      %v558 = vld [vmem:[%s4 + $0xa0] sm:$0xff]
      %v559 = vld [vmem:[%s4 + $0xa8] sm:$0xff]
      %v560 = vld [vmem:[%s4 + $0xb0] sm:$0xff]
      %v561 = vld [vmem:[%s4 + $0xb8] sm:$0xff]
      %v562 = vld [vmem:[%s4 + $0xc0] sm:$0xff]
      %v563 = vld [vmem:[%s4 + $0xc8] sm:$0xff]
      %v564 = vld [vmem:[%s4 + $0xd0] sm:$0xff]
      %v565 = vld [vmem:[%s4 + $0xd8] sm:$0xff]
      %v566 = vld [vmem:[%s4 + $0xe0] sm:$0xff]
      %v567 = vld [vmem:[%s4 + $0xe8] sm:$0xff]
      %v568 = vld [vmem:[%s4 + $0xf0] sm:$0xff]
      %v569 = vld [vmem:[%s4 + $0xf8] sm:$0xff]
      %v570 = vld [vmem:[%s5] sm:$0xff]
      %v572 = vlaneseq
      %v573 = vshrl.u32 %v572, 7
      %v574 = vsub.s32 0, %v573
      %v575 = vrot.slane %v570, %v574
      %v576 = vlaneseq
      %v577 = vshrl.u32 %v576, 7
      %v578 = vsub.s32 1, %v577
      %v579 = vrot.slane %v570, %v578
      %v580 = vlaneseq
      %v581 = vshrl.u32 %v580, 7
      %v582 = vsub.s32 2, %v581
      %v583 = vrot.slane %v570, %v582
      %v584 = vlaneseq
      %v585 = vshrl.u32 %v584, 7
      %v586 = vsub.s32 3, %v585
      %v587 = vrot.slane %v570, %v586
      %v588 = vlaneseq
      %v589 = vshrl.u32 %v588, 7
      %v590 = vsub.s32 4, %v589
      %v591 = vrot.slane %v570, %v590
      %v592 = vlaneseq
      %v593 = vshrl.u32 %v592, 7
      %v594 = vsub.s32 5, %v593
      %v595 = vrot.slane %v570, %v594
      %v596 = vlaneseq
      %v597 = vshrl.u32 %v596, 7
      %v598 = vsub.s32 6, %v597
      %v599 = vrot.slane %v570, %v598
      %v600 = vlaneseq
      %v601 = vshrl.u32 %v600, 7
      %v602 = vsub.s32 7, %v601
      %v603 = vrot.slane %v570, %v602
      %vm612 = vcmask 261120
      %v614 = vsel %vm612, %v522, 0
      %v617 = vsel %vm612, %v523, 0
      %v620 = vsel %vm612, %v524, 0
      %v623 = vsel %vm612, %v525, 0
      %v626 = vsel %vm612, %v526, 0
      %v629 = vsel %vm612, %v527, 0
      %v632 = vsel %vm612, %v528, 0
      %v635 = vsel %vm612, %v529, 0
      %v638 = vsel %vm612, %v530, 0
      %v641 = vsel %vm612, %v531, 0
      %v644 = vsel %vm612, %v532, 0
      %v647 = vsel %vm612, %v533, 0
      %v650 = vsel %vm612, %v534, 0
      %v653 = vsel %vm612, %v535, 0
      %v656 = vsel %vm612, %v536, 0
      %v659 = vsel %vm612, %v537, 0
      %661 = vmatprep.subr.mxu0 0.0
      %662 = vmatpush1.msra.mxu0 0.0
      %663 = vmatprep.subr.mxu0 0.0
      %664 = vmatpush1.msra.mxu0 0.0
      %665 = vmatprep.subr.mxu0 0.0
      %666 = vmatpush1.msra.mxu0 0.0
      %667 = vmatprep.subr.mxu0 0.0
      %668 = vmatpush1.msra.mxu0 0.0
      %669 = vmatprep.subr.mxu0 0.0
      %670 = vmatpush1.msra.mxu0 0.0
      %671 = vmatprep.subr.mxu0 0.0
      %672 = vmatpush1.msra.mxu0 0.0
      %673 = vmatprep.subr.mxu0 0.0
      %674 = vmatpush1.msra.mxu0 0.0
      %675 = vmatprep.subr.mxu0 0.0
      %676 = vmatpush1.msra.mxu0 0.0
      %677 = vmatprep.subr.mxu0 0.0
      %678 = vmatpush1.msra.mxu0 0.0
      %679 = vmatprep.subr.mxu0 0.0
      %680 = vmatpush1.msra.mxu0 0.0
      %681 = vmatprep.subr.mxu0 0.0
      %682 = vmatpush1.msra.mxu0 0.0
      %683 = vmatprep.subr.mxu0 0.0
      %684 = vmatpush1.msra.mxu0 0.0
      %685 = vmatprep.subr.mxu0 %v563
      %686 = vmatpush1.msra.mxu0 %v562
      %687 = vmatprep.subr.mxu0 %v555
      %688 = vmatpush1.msra.mxu0 %v554
      %689 = vmatprep.subr.mxu0 %v547
      %690 = vmatpush1.msra.mxu0 %v546
      %691 = vmatprep.subr.mxu0 %v539
      %692 = vmatpush1.msra.mxu0 %v538
      %693 = vmatprep.subr.mxu0 0.0
      %694 = vmatpush2.msra.mxu0 0.0
      %695 = vmatprep.subr.mxu0 0.0
      %696 = vmatpush2.msra.mxu0 0.0
      %697 = vmatprep.subr.mxu0 0.0
      %698 = vmatpush2.msra.mxu0 0.0
      %699 = vmatprep.subr.mxu0 0.0
      %700 = vmatpush2.msra.mxu0 0.0
      %701 = vmatprep.subr.mxu0 0.0
      %702 = vmatpush2.msra.mxu0 0.0
      %703 = vmatprep.subr.mxu0 0.0
      %704 = vmatpush2.msra.mxu0 0.0
      %705 = vmatprep.subr.mxu0 0.0
      %706 = vmatpush2.msra.mxu0 0.0
      %707 = vmatprep.subr.mxu0 0.0
      %708 = vmatpush2.msra.mxu0 0.0
      %709 = vmatprep.subr.mxu0 0.0
      %710 = vmatpush2.msra.mxu0 0.0
      %711 = vmatprep.subr.mxu0 0.0
      %712 = vmatpush2.msra.mxu0 0.0
      %713 = vmatprep.subr.mxu0 0.0
      %714 = vmatpush2.msra.mxu0 0.0
      %715 = vmatprep.subr.mxu0 0.0
      %716 = vmatpush2.msra.mxu0 0.0
      %717 = vmatprep.subr.mxu0 0.0
      %718 = vmatpush2.msra.mxu0 0.0
      %719 = vmatprep.subr.mxu0 0.0
      %720 = vmatpush2.msra.mxu0 0.0
      %721 = vmatprep.subr.mxu0 0.0
      %722 = vmatpush2.msra.mxu0 0.0
      %723 = vmatprep.subr.mxu0 0.0
      %724 = vmatpush2.msra.mxu0 0.0
      %725 = vmatprep.mubr.f32.mxu0 0.0
      %726 = vmatmul.mubr.f32.gmra.mxu0 %v614
      %v727 = vpop.f32.mrf.mxu0
      %v728 = vadd.f32 %v575, %v727
      %v729 = vpop.f32.mrf.mxu0
      %v730 = vadd.f32 %v579, %v729
      %731 = vmatprep.mubr.f32.mxu0 0.0
      %732 = vmatmul.mubr.f32.gmra.mxu0 %v617
      %v733 = vpop.f32.mrf.mxu0
      %v734 = vadd.f32 %v575, %v733
      %v735 = vpop.f32.mrf.mxu0
      %v736 = vadd.f32 %v579, %v735
      %737 = vmatprep.mubr.f32.mxu0 0.0
      %738 = vmatmul.mubr.f32.gmra.mxu0 %v620
      %v739 = vpop.f32.mrf.mxu0
      %v740 = vadd.f32 %v575, %v739
      %v741 = vpop.f32.mrf.mxu0
      %v742 = vadd.f32 %v579, %v741
      %743 = vmatprep.mubr.f32.mxu0 0.0
      %744 = vmatmul.mubr.f32.gmra.mxu0 %v623
      %v745 = vpop.f32.mrf.mxu0
      %v746 = vadd.f32 %v575, %v745
      %v747 = vpop.f32.mrf.mxu0
      %v748 = vadd.f32 %v579, %v747
      %749 = vmatprep.mubr.f32.mxu0 0.0
      %750 = vmatmul.mubr.f32.gmra.mxu0 %v626
      %v751 = vpop.f32.mrf.mxu0
      %v752 = vadd.f32 %v575, %v751
      %v753 = vpop.f32.mrf.mxu0
      %v754 = vadd.f32 %v579, %v753
      %755 = vmatprep.mubr.f32.mxu0 0.0
      %756 = vmatmul.mubr.f32.gmra.mxu0 %v629
      %v757 = vpop.f32.mrf.mxu0
      %v758 = vadd.f32 %v575, %v757
      %v759 = vpop.f32.mrf.mxu0
      %v760 = vadd.f32 %v579, %v759
      %761 = vmatprep.mubr.f32.mxu0 0.0
      %762 = vmatmul.mubr.f32.gmra.mxu0 %v632
      %v763 = vpop.f32.mrf.mxu0
      %v764 = vadd.f32 %v575, %v763
      %v765 = vpop.f32.mrf.mxu0
      %v766 = vadd.f32 %v579, %v765
      %767 = vmatprep.mubr.f32.mxu0 0.0
      %768 = vmatmul.mubr.f32.gmra.mxu0 %v635
      %v769 = vpop.f32.mrf.mxu0
      %v770 = vadd.f32 %v575, %v769
      %v771 = vpop.f32.mrf.mxu0
      %v772 = vadd.f32 %v579, %v771
      %773 = vmatprep.mubr.f32.mxu0 0.0
      %774 = vmatmul.mubr.f32.gmra.mxu0 %v638
      %v775 = vpop.f32.mrf.mxu0
      %v776 = vadd.f32 %v575, %v775
      %v777 = vpop.f32.mrf.mxu0
      %v778 = vadd.f32 %v579, %v777
      %779 = vmatprep.mubr.f32.mxu0 0.0
      %780 = vmatmul.mubr.f32.gmra.mxu0 %v641
      %v781 = vpop.f32.mrf.mxu0
      %v782 = vadd.f32 %v575, %v781
      %v783 = vpop.f32.mrf.mxu0
      %v784 = vadd.f32 %v579, %v783
      %785 = vmatprep.mubr.f32.mxu0 0.0
      %786 = vmatmul.mubr.f32.gmra.mxu0 %v644
      %v787 = vpop.f32.mrf.mxu0
      %v788 = vadd.f32 %v575, %v787
      %v789 = vpop.f32.mrf.mxu0
      %v790 = vadd.f32 %v579, %v789
      %791 = vmatprep.mubr.f32.mxu0 0.0
      %792 = vmatmul.mubr.f32.gmra.mxu0 %v647
      %v793 = vpop.f32.mrf.mxu0
      %v794 = vadd.f32 %v575, %v793
      %v795 = vpop.f32.mrf.mxu0
      %v796 = vadd.f32 %v579, %v795
      %797 = vmatprep.mubr.f32.mxu0 0.0
      %798 = vmatmul.mubr.f32.gmra.mxu0 %v650
      %v799 = vpop.f32.mrf.mxu0
      %v800 = vadd.f32 %v575, %v799
      %v801 = vpop.f32.mrf.mxu0
      %v802 = vadd.f32 %v579, %v801
      %803 = vmatprep.mubr.f32.mxu0 0.0
      %804 = vmatmul.mubr.f32.gmra.mxu0 %v653
      %v805 = vpop.f32.mrf.mxu0
      %v806 = vadd.f32 %v575, %v805
      %v807 = vpop.f32.mrf.mxu0
      %v808 = vadd.f32 %v579, %v807
      %809 = vmatprep.mubr.f32.mxu0 0.0
      %810 = vmatmul.mubr.f32.gmra.mxu0 %v656
      %v811 = vpop.f32.mrf.mxu0
      %v812 = vadd.f32 %v575, %v811
      %v813 = vpop.f32.mrf.mxu0
      %v814 = vadd.f32 %v579, %v813
      %815 = vmatprep.mubr.f32.mxu0 0.0
      %816 = vmatmul.mubr.f32.gmra.mxu0 %v659
      %v817 = vpop.f32.mrf.mxu0
      %v818 = vadd.f32 %v575, %v817
      %v819 = vpop.f32.mrf.mxu0
      %v820 = vadd.f32 %v579, %v819
      %821 = vdwg.mxu0
      %822 = vmatprep.subr.mxu0 0.0
      %823 = vmatpush1.msra.mxu0 0.0
      %824 = vmatprep.subr.mxu0 0.0
      %825 = vmatpush1.msra.mxu0 0.0
      %826 = vmatprep.subr.mxu0 0.0
      %827 = vmatpush1.msra.mxu0 0.0
      %828 = vmatprep.subr.mxu0 0.0
      %829 = vmatpush1.msra.mxu0 0.0
      %830 = vmatprep.subr.mxu0 0.0
      %831 = vmatpush1.msra.mxu0 0.0
      %832 = vmatprep.subr.mxu0 0.0
      %833 = vmatpush1.msra.mxu0 0.0
      %834 = vmatprep.subr.mxu0 0.0
      %835 = vmatpush1.msra.mxu0 0.0
      %836 = vmatprep.subr.mxu0 0.0
      %837 = vmatpush1.msra.mxu0 0.0
      %838 = vmatprep.subr.mxu0 0.0
      %839 = vmatpush1.msra.mxu0 0.0
      %840 = vmatprep.subr.mxu0 0.0
      %841 = vmatpush1.msra.mxu0 0.0
      %842 = vmatprep.subr.mxu0 0.0
      %843 = vmatpush1.msra.mxu0 0.0
      %844 = vmatprep.subr.mxu0 0.0
      %845 = vmatpush1.msra.mxu0 0.0
      %846 = vmatprep.subr.mxu0 %v565
      %847 = vmatpush1.msra.mxu0 %v564
      %848 = vmatprep.subr.mxu0 %v557
      %849 = vmatpush1.msra.mxu0 %v556
      %850 = vmatprep.subr.mxu0 %v549
      %851 = vmatpush1.msra.mxu0 %v548
      %852 = vmatprep.subr.mxu0 %v541
      %853 = vmatpush1.msra.mxu0 %v540
      %854 = vmatprep.subr.mxu0 0.0
      %855 = vmatpush2.msra.mxu0 0.0
      %856 = vmatprep.subr.mxu0 0.0
      %857 = vmatpush2.msra.mxu0 0.0
      %858 = vmatprep.subr.mxu0 0.0
      %859 = vmatpush2.msra.mxu0 0.0
      %860 = vmatprep.subr.mxu0 0.0
      %861 = vmatpush2.msra.mxu0 0.0
      %862 = vmatprep.subr.mxu0 0.0
      %863 = vmatpush2.msra.mxu0 0.0
      %864 = vmatprep.subr.mxu0 0.0
      %865 = vmatpush2.msra.mxu0 0.0
      %866 = vmatprep.subr.mxu0 0.0
      %867 = vmatpush2.msra.mxu0 0.0
      %868 = vmatprep.subr.mxu0 0.0
      %869 = vmatpush2.msra.mxu0 0.0
      %870 = vmatprep.subr.mxu0 0.0
      %871 = vmatpush2.msra.mxu0 0.0
      %872 = vmatprep.subr.mxu0 0.0
      %873 = vmatpush2.msra.mxu0 0.0
      %874 = vmatprep.subr.mxu0 0.0
      %875 = vmatpush2.msra.mxu0 0.0
      %876 = vmatprep.subr.mxu0 0.0
      %877 = vmatpush2.msra.mxu0 0.0
      %878 = vmatprep.subr.mxu0 0.0
      %879 = vmatpush2.msra.mxu0 0.0
      %880 = vmatprep.subr.mxu0 0.0
      %881 = vmatpush2.msra.mxu0 0.0
      %882 = vmatprep.subr.mxu0 0.0
      %883 = vmatpush2.msra.mxu0 0.0
      %884 = vmatprep.subr.mxu0 0.0
      %885 = vmatpush2.msra.mxu0 0.0
      %886 = vmatprep.mubr.f32.mxu0 0.0
      %887 = vmatmul.mubr.f32.gmra.mxu0 %v614
      %v888 = vpop.f32.mrf.mxu0
      %v889 = vadd.f32 %v583, %v888
      %v890 = vpop.f32.mrf.mxu0
      %v891 = vadd.f32 %v587, %v890
      %892 = vmatprep.mubr.f32.mxu0 0.0
      %893 = vmatmul.mubr.f32.gmra.mxu0 %v617
      %v894 = vpop.f32.mrf.mxu0
      %v895 = vadd.f32 %v583, %v894
      %v896 = vpop.f32.mrf.mxu0
      %v897 = vadd.f32 %v587, %v896
      %898 = vmatprep.mubr.f32.mxu0 0.0
      %899 = vmatmul.mubr.f32.gmra.mxu0 %v620
      %v900 = vpop.f32.mrf.mxu0
      %v901 = vadd.f32 %v583, %v900
      %v902 = vpop.f32.mrf.mxu0
      %v903 = vadd.f32 %v587, %v902
      %904 = vmatprep.mubr.f32.mxu0 0.0
      %905 = vmatmul.mubr.f32.gmra.mxu0 %v623
      %v906 = vpop.f32.mrf.mxu0
      %v907 = vadd.f32 %v583, %v906
      %v908 = vpop.f32.mrf.mxu0
      %v909 = vadd.f32 %v587, %v908
      %910 = vmatprep.mubr.f32.mxu0 0.0
      %911 = vmatmul.mubr.f32.gmra.mxu0 %v626
      %v912 = vpop.f32.mrf.mxu0
      %v913 = vadd.f32 %v583, %v912
      %v914 = vpop.f32.mrf.mxu0
      %v915 = vadd.f32 %v587, %v914
      %916 = vmatprep.mubr.f32.mxu0 0.0
      %917 = vmatmul.mubr.f32.gmra.mxu0 %v629
      %v918 = vpop.f32.mrf.mxu0
      %v919 = vadd.f32 %v583, %v918
      %v920 = vpop.f32.mrf.mxu0
      %v921 = vadd.f32 %v587, %v920
      %922 = vmatprep.mubr.f32.mxu0 0.0
      %923 = vmatmul.mubr.f32.gmra.mxu0 %v632
      %v924 = vpop.f32.mrf.mxu0
      %v925 = vadd.f32 %v583, %v924
      %v926 = vpop.f32.mrf.mxu0
      %v927 = vadd.f32 %v587, %v926
      %928 = vmatprep.mubr.f32.mxu0 0.0
      %929 = vmatmul.mubr.f32.gmra.mxu0 %v635
      %v930 = vpop.f32.mrf.mxu0
      %v931 = vadd.f32 %v583, %v930
      %v932 = vpop.f32.mrf.mxu0
      %v933 = vadd.f32 %v587, %v932
      %934 = vmatprep.mubr.f32.mxu0 0.0
      %935 = vmatmul.mubr.f32.gmra.mxu0 %v638
      %v936 = vpop.f32.mrf.mxu0
      %v937 = vadd.f32 %v583, %v936
      %v938 = vpop.f32.mrf.mxu0
      %v939 = vadd.f32 %v587, %v938
      %940 = vmatprep.mubr.f32.mxu0 0.0
      %941 = vmatmul.mubr.f32.gmra.mxu0 %v641
      %v942 = vpop.f32.mrf.mxu0
      %v943 = vadd.f32 %v583, %v942
      %v944 = vpop.f32.mrf.mxu0
      %v945 = vadd.f32 %v587, %v944
      %946 = vmatprep.mubr.f32.mxu0 0.0
      %947 = vmatmul.mubr.f32.gmra.mxu0 %v644
      %v948 = vpop.f32.mrf.mxu0
      %v949 = vadd.f32 %v583, %v948
      %v950 = vpop.f32.mrf.mxu0
      %v951 = vadd.f32 %v587, %v950
      %952 = vmatprep.mubr.f32.mxu0 0.0
      %953 = vmatmul.mubr.f32.gmra.mxu0 %v647
      %v954 = vpop.f32.mrf.mxu0
      %v955 = vadd.f32 %v583, %v954
      %v956 = vpop.f32.mrf.mxu0
      %v957 = vadd.f32 %v587, %v956
      %958 = vmatprep.mubr.f32.mxu0 0.0
      %959 = vmatmul.mubr.f32.gmra.mxu0 %v650
      %v960 = vpop.f32.mrf.mxu0
      %v961 = vadd.f32 %v583, %v960
      %v962 = vpop.f32.mrf.mxu0
      %v963 = vadd.f32 %v587, %v962
      %964 = vmatprep.mubr.f32.mxu0 0.0
      %965 = vmatmul.mubr.f32.gmra.mxu0 %v653
      %v966 = vpop.f32.mrf.mxu0
      %v967 = vadd.f32 %v583, %v966
      %v968 = vpop.f32.mrf.mxu0
      %v969 = vadd.f32 %v587, %v968
      %970 = vmatprep.mubr.f32.mxu0 0.0
      %971 = vmatmul.mubr.f32.gmra.mxu0 %v656
      %v972 = vpop.f32.mrf.mxu0
      %v973 = vadd.f32 %v583, %v972
      %v974 = vpop.f32.mrf.mxu0
      %v975 = vadd.f32 %v587, %v974
      %976 = vmatprep.mubr.f32.mxu0 0.0
      %977 = vmatmul.mubr.f32.gmra.mxu0 %v659
      %v978 = vpop.f32.mrf.mxu0
      %v979 = vadd.f32 %v583, %v978
      %v980 = vpop.f32.mrf.mxu0
      %v981 = vadd.f32 %v587, %v980
      %982 = vdwg.mxu0
      %983 = vmatprep.subr.mxu0 0.0
      %984 = vmatpush1.msra.mxu0 0.0
      %985 = vmatprep.subr.mxu0 0.0
      %986 = vmatpush1.msra.mxu0 0.0
      %987 = vmatprep.subr.mxu0 0.0
      %988 = vmatpush1.msra.mxu0 0.0
      %989 = vmatprep.subr.mxu0 0.0
      %990 = vmatpush1.msra.mxu0 0.0
      %991 = vmatprep.subr.mxu0 0.0
      %992 = vmatpush1.msra.mxu0 0.0
      %993 = vmatprep.subr.mxu0 0.0
      %994 = vmatpush1.msra.mxu0 0.0
      %995 = vmatprep.subr.mxu0 0.0
      %996 = vmatpush1.msra.mxu0 0.0
      %997 = vmatprep.subr.mxu0 0.0
      %998 = vmatpush1.msra.mxu0 0.0
      %999 = vmatprep.subr.mxu0 0.0
      %1000 = vmatpush1.msra.mxu0 0.0
      %1001 = vmatprep.subr.mxu0 0.0
      %1002 = vmatpush1.msra.mxu0 0.0
      %1003 = vmatprep.subr.mxu0 0.0
      %1004 = vmatpush1.msra.mxu0 0.0
      %1005 = vmatprep.subr.mxu0 0.0
      %1006 = vmatpush1.msra.mxu0 0.0
      %1007 = vmatprep.subr.mxu0 %v567
      %1008 = vmatpush1.msra.mxu0 %v566
      %1009 = vmatprep.subr.mxu0 %v559
      %1010 = vmatpush1.msra.mxu0 %v558
      %1011 = vmatprep.subr.mxu0 %v551
      %1012 = vmatpush1.msra.mxu0 %v550
      %1013 = vmatprep.subr.mxu0 %v543
      %1014 = vmatpush1.msra.mxu0 %v542
      %1015 = vmatprep.subr.mxu0 0.0
      %1016 = vmatpush2.msra.mxu0 0.0
      %1017 = vmatprep.subr.mxu0 0.0
      %1018 = vmatpush2.msra.mxu0 0.0
      %1019 = vmatprep.subr.mxu0 0.0
      %1020 = vmatpush2.msra.mxu0 0.0
      %1021 = vmatprep.subr.mxu0 0.0
      %1022 = vmatpush2.msra.mxu0 0.0
      %1023 = vmatprep.subr.mxu0 0.0
      %1024 = vmatpush2.msra.mxu0 0.0
      %1025 = vmatprep.subr.mxu0 0.0
      %1026 = vmatpush2.msra.mxu0 0.0
      %1027 = vmatprep.subr.mxu0 0.0
      %1028 = vmatpush2.msra.mxu0 0.0
      %1029 = vmatprep.subr.mxu0 0.0
      %1030 = vmatpush2.msra.mxu0 0.0
      %1031 = vmatprep.subr.mxu0 0.0
      %1032 = vmatpush2.msra.mxu0 0.0
      %1033 = vmatprep.subr.mxu0 0.0
      %1034 = vmatpush2.msra.mxu0 0.0
      %1035 = vmatprep.subr.mxu0 0.0
      %1036 = vmatpush2.msra.mxu0 0.0
      %1037 = vmatprep.subr.mxu0 0.0
      %1038 = vmatpush2.msra.mxu0 0.0
      %1039 = vmatprep.subr.mxu0 0.0
      %1040 = vmatpush2.msra.mxu0 0.0
      %1041 = vmatprep.subr.mxu0 0.0
      %1042 = vmatpush2.msra.mxu0 0.0
      %1043 = vmatprep.subr.mxu0 0.0
      %1044 = vmatpush2.msra.mxu0 0.0
      %1045 = vmatprep.subr.mxu0 0.0
      %1046 = vmatpush2.msra.mxu0 0.0
      %1047 = vmatprep.mubr.f32.mxu0 0.0
      %1048 = vmatmul.mubr.f32.gmra.mxu0 %v614
      %v1049 = vpop.f32.mrf.mxu0
      %v1050 = vadd.f32 %v591, %v1049
      %v1051 = vpop.f32.mrf.mxu0
      %v1052 = vadd.f32 %v595, %v1051
      %1053 = vmatprep.mubr.f32.mxu0 0.0
      %1054 = vmatmul.mubr.f32.gmra.mxu0 %v617
      %v1055 = vpop.f32.mrf.mxu0
      %v1056 = vadd.f32 %v591, %v1055
      %v1057 = vpop.f32.mrf.mxu0
      %v1058 = vadd.f32 %v595, %v1057
      %1059 = vmatprep.mubr.f32.mxu0 0.0
      %1060 = vmatmul.mubr.f32.gmra.mxu0 %v620
      %v1061 = vpop.f32.mrf.mxu0
      %v1062 = vadd.f32 %v591, %v1061
      %v1063 = vpop.f32.mrf.mxu0
      %v1064 = vadd.f32 %v595, %v1063
      %1065 = vmatprep.mubr.f32.mxu0 0.0
      %1066 = vmatmul.mubr.f32.gmra.mxu0 %v623
      %v1067 = vpop.f32.mrf.mxu0
      %v1068 = vadd.f32 %v591, %v1067
      %v1069 = vpop.f32.mrf.mxu0
      %v1070 = vadd.f32 %v595, %v1069
      %1071 = vmatprep.mubr.f32.mxu0 0.0
      %1072 = vmatmul.mubr.f32.gmra.mxu0 %v626
      %v1073 = vpop.f32.mrf.mxu0
      %v1074 = vadd.f32 %v591, %v1073
      %v1075 = vpop.f32.mrf.mxu0
      %v1076 = vadd.f32 %v595, %v1075
      %1077 = vmatprep.mubr.f32.mxu0 0.0
      %1078 = vmatmul.mubr.f32.gmra.mxu0 %v629
      %v1079 = vpop.f32.mrf.mxu0
      %v1080 = vadd.f32 %v591, %v1079
      %v1081 = vpop.f32.mrf.mxu0
      %v1082 = vadd.f32 %v595, %v1081
      %1083 = vmatprep.mubr.f32.mxu0 0.0
      %1084 = vmatmul.mubr.f32.gmra.mxu0 %v632
      %v1085 = vpop.f32.mrf.mxu0
      %v1086 = vadd.f32 %v591, %v1085
      %v1087 = vpop.f32.mrf.mxu0
      %v1088 = vadd.f32 %v595, %v1087
      %1089 = vmatprep.mubr.f32.mxu0 0.0
      %1090 = vmatmul.mubr.f32.gmra.mxu0 %v635
      %v1091 = vpop.f32.mrf.mxu0
      %v1092 = vadd.f32 %v591, %v1091
      %v1093 = vpop.f32.mrf.mxu0
      %v1094 = vadd.f32 %v595, %v1093
      %1095 = vmatprep.mubr.f32.mxu0 0.0
      %1096 = vmatmul.mubr.f32.gmra.mxu0 %v638
      %v1097 = vpop.f32.mrf.mxu0
      %v1098 = vadd.f32 %v591, %v1097
      %v1099 = vpop.f32.mrf.mxu0
      %v1100 = vadd.f32 %v595, %v1099
      %1101 = vmatprep.mubr.f32.mxu0 0.0
      %1102 = vmatmul.mubr.f32.gmra.mxu0 %v641
      %v1103 = vpop.f32.mrf.mxu0
      %v1104 = vadd.f32 %v591, %v1103
      %v1105 = vpop.f32.mrf.mxu0
      %v1106 = vadd.f32 %v595, %v1105
      %1107 = vmatprep.mubr.f32.mxu0 0.0
      %1108 = vmatmul.mubr.f32.gmra.mxu0 %v644
      %v1109 = vpop.f32.mrf.mxu0
      %v1110 = vadd.f32 %v591, %v1109
      %v1111 = vpop.f32.mrf.mxu0
      %v1112 = vadd.f32 %v595, %v1111
      %1113 = vmatprep.mubr.f32.mxu0 0.0
      %1114 = vmatmul.mubr.f32.gmra.mxu0 %v647
      %v1115 = vpop.f32.mrf.mxu0
      %v1116 = vadd.f32 %v591, %v1115
      %v1117 = vpop.f32.mrf.mxu0
      %v1118 = vadd.f32 %v595, %v1117
      %1119 = vmatprep.mubr.f32.mxu0 0.0
      %1120 = vmatmul.mubr.f32.gmra.mxu0 %v650
      %v1121 = vpop.f32.mrf.mxu0
      %v1122 = vadd.f32 %v591, %v1121
      %v1123 = vpop.f32.mrf.mxu0
      %v1124 = vadd.f32 %v595, %v1123
      %1125 = vmatprep.mubr.f32.mxu0 0.0
      %1126 = vmatmul.mubr.f32.gmra.mxu0 %v653
      %v1127 = vpop.f32.mrf.mxu0
      %v1128 = vadd.f32 %v591, %v1127
      %v1129 = vpop.f32.mrf.mxu0
      %v1130 = vadd.f32 %v595, %v1129
      %1131 = vmatprep.mubr.f32.mxu0 0.0
      %1132 = vmatmul.mubr.f32.gmra.mxu0 %v656
      %v1133 = vpop.f32.mrf.mxu0
      %v1134 = vadd.f32 %v591, %v1133
      %v1135 = vpop.f32.mrf.mxu0
      %v1136 = vadd.f32 %v595, %v1135
      %1137 = vmatprep.mubr.f32.mxu0 0.0
      %1138 = vmatmul.mubr.f32.gmra.mxu0 %v659
      %v1139 = vpop.f32.mrf.mxu0
      %v1140 = vadd.f32 %v591, %v1139
      %v1141 = vpop.f32.mrf.mxu0
      %v1142 = vadd.f32 %v595, %v1141
      %1143 = vdwg.mxu0
      %1144 = vmatprep.subr.mxu0 0.0
      %1145 = vmatpush1.msra.mxu0 0.0
      %1146 = vmatprep.subr.mxu0 0.0
      %1147 = vmatpush1.msra.mxu0 0.0
      %1148 = vmatprep.subr.mxu0 0.0
      %1149 = vmatpush1.msra.mxu0 0.0
      %1150 = vmatprep.subr.mxu0 0.0
      %1151 = vmatpush1.msra.mxu0 0.0
      %1152 = vmatprep.subr.mxu0 0.0
      %1153 = vmatpush1.msra.mxu0 0.0
      %1154 = vmatprep.subr.mxu0 0.0
      %1155 = vmatpush1.msra.mxu0 0.0
      %1156 = vmatprep.subr.mxu0 0.0
      %1157 = vmatpush1.msra.mxu0 0.0
      %1158 = vmatprep.subr.mxu0 0.0
      %1159 = vmatpush1.msra.mxu0 0.0
      %1160 = vmatprep.subr.mxu0 0.0
      %1161 = vmatpush1.msra.mxu0 0.0
      %1162 = vmatprep.subr.mxu0 0.0
      %1163 = vmatpush1.msra.mxu0 0.0
      %1164 = vmatprep.subr.mxu0 0.0
      %1165 = vmatpush1.msra.mxu0 0.0
      %1166 = vmatprep.subr.mxu0 0.0
      %1167 = vmatpush1.msra.mxu0 0.0
      %1168 = vmatprep.subr.mxu0 %v569
      %1169 = vmatpush1.msra.mxu0 %v568
      %1170 = vmatprep.subr.mxu0 %v561
      %1171 = vmatpush1.msra.mxu0 %v560
      %1172 = vmatprep.subr.mxu0 %v553
      %1173 = vmatpush1.msra.mxu0 %v552
      %1174 = vmatprep.subr.mxu0 %v545
      %1175 = vmatpush1.msra.mxu0 %v544
      %1176 = vmatprep.subr.mxu0 0.0
      %1177 = vmatpush2.msra.mxu0 0.0
      %1178 = vmatprep.subr.mxu0 0.0
      %1179 = vmatpush2.msra.mxu0 0.0
      %1180 = vmatprep.subr.mxu0 0.0
      %1181 = vmatpush2.msra.mxu0 0.0
      %1182 = vmatprep.subr.mxu0 0.0
      %1183 = vmatpush2.msra.mxu0 0.0
      %1184 = vmatprep.subr.mxu0 0.0
      %1185 = vmatpush2.msra.mxu0 0.0
      %1186 = vmatprep.subr.mxu0 0.0
      %1187 = vmatpush2.msra.mxu0 0.0
      %1188 = vmatprep.subr.mxu0 0.0
      %1189 = vmatpush2.msra.mxu0 0.0
      %1190 = vmatprep.subr.mxu0 0.0
      %1191 = vmatpush2.msra.mxu0 0.0
      %1192 = vmatprep.subr.mxu0 0.0
      %1193 = vmatpush2.msra.mxu0 0.0
      %1194 = vmatprep.subr.mxu0 0.0
      %1195 = vmatpush2.msra.mxu0 0.0
      %1196 = vmatprep.subr.mxu0 0.0
      %1197 = vmatpush2.msra.mxu0 0.0
      %1198 = vmatprep.subr.mxu0 0.0
      %1199 = vmatpush2.msra.mxu0 0.0
      %1200 = vmatprep.subr.mxu0 0.0
      %1201 = vmatpush2.msra.mxu0 0.0
      %1202 = vmatprep.subr.mxu0 0.0
      %1203 = vmatpush2.msra.mxu0 0.0
      %1204 = vmatprep.subr.mxu0 0.0
      %1205 = vmatpush2.msra.mxu0 0.0
      %1206 = vmatprep.subr.mxu0 0.0
      %1207 = vmatpush2.msra.mxu0 0.0
      %1208 = vmatprep.mubr.f32.mxu0 0.0
      %1209 = vmatmul.mubr.f32.gmra.mxu0 %v614
      %v1210 = vpop.f32.mrf.mxu0
      %v1211 = vadd.f32 %v599, %v1210
      %v1212 = vpop.f32.mrf.mxu0
      %v1213 = vadd.f32 %v603, %v1212
      %1214 = vmatprep.mubr.f32.mxu0 0.0
      %1215 = vmatmul.mubr.f32.gmra.mxu0 %v617
      %v1216 = vpop.f32.mrf.mxu0
      %v1217 = vadd.f32 %v599, %v1216
      %v1218 = vpop.f32.mrf.mxu0
      %v1219 = vadd.f32 %v603, %v1218
      %1220 = vmatprep.mubr.f32.mxu0 0.0
      %1221 = vmatmul.mubr.f32.gmra.mxu0 %v620
      %v1222 = vpop.f32.mrf.mxu0
      %v1223 = vadd.f32 %v599, %v1222
      %v1224 = vpop.f32.mrf.mxu0
      %v1225 = vadd.f32 %v603, %v1224
      %1226 = vmatprep.mubr.f32.mxu0 0.0
      %1227 = vmatmul.mubr.f32.gmra.mxu0 %v623
      %v1228 = vpop.f32.mrf.mxu0
      %v1229 = vadd.f32 %v599, %v1228
      %v1230 = vpop.f32.mrf.mxu0
      %v1231 = vadd.f32 %v603, %v1230
      %1232 = vmatprep.mubr.f32.mxu0 0.0
      %1233 = vmatmul.mubr.f32.gmra.mxu0 %v626
      %v1234 = vpop.f32.mrf.mxu0
      %v1235 = vadd.f32 %v599, %v1234
      %v1236 = vpop.f32.mrf.mxu0
      %v1237 = vadd.f32 %v603, %v1236
      %1238 = vmatprep.mubr.f32.mxu0 0.0
      %1239 = vmatmul.mubr.f32.gmra.mxu0 %v629
      %v1240 = vpop.f32.mrf.mxu0
      %v1241 = vadd.f32 %v599, %v1240
      %v1242 = vpop.f32.mrf.mxu0
      %v1243 = vadd.f32 %v603, %v1242
      %1244 = vmatprep.mubr.f32.mxu0 0.0
      %1245 = vmatmul.mubr.f32.gmra.mxu0 %v632
      %v1246 = vpop.f32.mrf.mxu0
      %v1247 = vadd.f32 %v599, %v1246
      %v1248 = vpop.f32.mrf.mxu0
      %v1249 = vadd.f32 %v603, %v1248
      %1250 = vmatprep.mubr.f32.mxu0 0.0
      %1251 = vmatmul.mubr.f32.gmra.mxu0 %v635
      %v1252 = vpop.f32.mrf.mxu0
      %v1253 = vadd.f32 %v599, %v1252
      %v1254 = vpop.f32.mrf.mxu0
      %v1255 = vadd.f32 %v603, %v1254
      %1256 = vmatprep.mubr.f32.mxu0 0.0
      %1257 = vmatmul.mubr.f32.gmra.mxu0 %v638
      %v1258 = vpop.f32.mrf.mxu0
      %v1259 = vadd.f32 %v599, %v1258
      %v1260 = vpop.f32.mrf.mxu0
      %v1261 = vadd.f32 %v603, %v1260
      %1262 = vmatprep.mubr.f32.mxu0 0.0
      %1263 = vmatmul.mubr.f32.gmra.mxu0 %v641
      %v1264 = vpop.f32.mrf.mxu0
      %v1265 = vadd.f32 %v599, %v1264
      %v1266 = vpop.f32.mrf.mxu0
      %v1267 = vadd.f32 %v603, %v1266
      %1268 = vmatprep.mubr.f32.mxu0 0.0
      %1269 = vmatmul.mubr.f32.gmra.mxu0 %v644
      %v1270 = vpop.f32.mrf.mxu0
      %v1271 = vadd.f32 %v599, %v1270
      %v1272 = vpop.f32.mrf.mxu0
      %v1273 = vadd.f32 %v603, %v1272
      %1274 = vmatprep.mubr.f32.mxu0 0.0
      %1275 = vmatmul.mubr.f32.gmra.mxu0 %v647
      %v1276 = vpop.f32.mrf.mxu0
      %v1277 = vadd.f32 %v599, %v1276
      %v1278 = vpop.f32.mrf.mxu0
      %v1279 = vadd.f32 %v603, %v1278
      %1280 = vmatprep.mubr.f32.mxu0 0.0
      %1281 = vmatmul.mubr.f32.gmra.mxu0 %v650
      %v1282 = vpop.f32.mrf.mxu0
      %v1283 = vadd.f32 %v599, %v1282
      %v1284 = vpop.f32.mrf.mxu0
      %v1285 = vadd.f32 %v603, %v1284
      %1286 = vmatprep.mubr.f32.mxu0 0.0
      %1287 = vmatmul.mubr.f32.gmra.mxu0 %v653
      %v1288 = vpop.f32.mrf.mxu0
      %v1289 = vadd.f32 %v599, %v1288
      %v1290 = vpop.f32.mrf.mxu0
      %v1291 = vadd.f32 %v603, %v1290
      %1292 = vmatprep.mubr.f32.mxu0 0.0
      %1293 = vmatmul.mubr.f32.gmra.mxu0 %v656
      %v1294 = vpop.f32.mrf.mxu0
      %v1295 = vadd.f32 %v599, %v1294
      %v1296 = vpop.f32.mrf.mxu0
      %v1297 = vadd.f32 %v603, %v1296
      %1298 = vmatprep.mubr.f32.mxu0 0.0
      %1299 = vmatmul.mubr.f32.gmra.mxu0 %v659
      %v1300 = vpop.f32.mrf.mxu0
      %v1301 = vadd.f32 %v599, %v1300
      %v1302 = vpop.f32.mrf.mxu0
      %v1303 = vadd.f32 %v603, %v1302
      %1304 = vdwg.mxu0
      %v1305 = vld [vmem:[%s296] sm:$0xff]
      %v1306 = vld [vmem:[%s296 + $0x8] sm:$0xff]
      %v1307 = vld [vmem:[%s296 + $0x10] sm:$0xff]
      %v1308 = vld [vmem:[%s296 + $0x18] sm:$0xff]
      %v1309 = vld [vmem:[%s296 + $0x20] sm:$0xff]
      %v1310 = vld [vmem:[%s296 + $0x28] sm:$0xff]
      %v1311 = vld [vmem:[%s296 + $0x30] sm:$0xff]
      %v1312 = vld [vmem:[%s296 + $0x38] sm:$0xff]
      %v1313 = vld [vmem:[%s296 + $0x40] sm:$0xff]
      %v1314 = vld [vmem:[%s296 + $0x48] sm:$0xff]
      %v1315 = vld [vmem:[%s296 + $0x50] sm:$0xff]
      %v1316 = vld [vmem:[%s296 + $0x58] sm:$0xff]
      %v1317 = vld [vmem:[%s296 + $0x60] sm:$0xff]
      %v1318 = vld [vmem:[%s296 + $0x68] sm:$0xff]
      %v1319 = vld [vmem:[%s296 + $0x70] sm:$0xff]
      %v1320 = vld [vmem:[%s296 + $0x78] sm:$0xff]
      %1337 = vrot.lane.b32.xlu0 %v1305, 32
      %v1338 = vpop.permute.xlu0 %1337
      %1339 = vrot.lane.b32.xlu0 %v1306, 32
      %v1340 = vpop.permute.xlu0 %1339
      %1341 = vrot.lane.b32.xlu0 %v1307, 32
      %v1342 = vpop.permute.xlu0 %1341
      %1343 = vrot.lane.b32.xlu0 %v1308, 32
      %v1344 = vpop.permute.xlu0 %1343
      %1345 = vrot.lane.b32.xlu0 %v1309, 32
      %v1346 = vpop.permute.xlu0 %1345
      %1347 = vrot.lane.b32.xlu0 %v1310, 32
      %v1348 = vpop.permute.xlu0 %1347
      %1349 = vrot.lane.b32.xlu0 %v1311, 32
      %v1350 = vpop.permute.xlu0 %1349
      %1351 = vrot.lane.b32.xlu0 %v1312, 32
      %v1352 = vpop.permute.xlu0 %1351
      %1353 = vrot.lane.b32.xlu0 %v1313, 32
      %v1354 = vpop.permute.xlu0 %1353
      %1355 = vrot.lane.b32.xlu0 %v1314, 32
      %v1356 = vpop.permute.xlu0 %1355
      %1357 = vrot.lane.b32.xlu0 %v1315, 32
      %v1358 = vpop.permute.xlu0 %1357
      %1359 = vrot.lane.b32.xlu0 %v1316, 32
      %v1360 = vpop.permute.xlu0 %1359
      %1361 = vrot.lane.b32.xlu0 %v1317, 32
      %v1362 = vpop.permute.xlu0 %1361
      %1363 = vrot.lane.b32.xlu0 %v1318, 32
      %v1364 = vpop.permute.xlu0 %1363
      %1365 = vrot.lane.b32.xlu0 %v1319, 32
      %v1366 = vpop.permute.xlu0 %1365
      %1367 = vrot.lane.b32.xlu0 %v1320, 32
      %v1368 = vpop.permute.xlu0 %1367
      %1385 = vrot.lane.b32.xlu0 %v1305, 64
      %v1386 = vpop.permute.xlu0 %1385
      %1387 = vrot.lane.b32.xlu0 %v1306, 64
      %v1388 = vpop.permute.xlu0 %1387
      %1389 = vrot.lane.b32.xlu0 %v1307, 64
      %v1390 = vpop.permute.xlu0 %1389
      %1391 = vrot.lane.b32.xlu0 %v1308, 64
      %v1392 = vpop.permute.xlu0 %1391
      %1393 = vrot.lane.b32.xlu0 %v1309, 64
      %v1394 = vpop.permute.xlu0 %1393
      %1395 = vrot.lane.b32.xlu0 %v1310, 64
      %v1396 = vpop.permute.xlu0 %1395
      %1397 = vrot.lane.b32.xlu0 %v1311, 64
      %v1398 = vpop.permute.xlu0 %1397
      %1399 = vrot.lane.b32.xlu0 %v1312, 64
      %v1400 = vpop.permute.xlu0 %1399
      %1401 = vrot.lane.b32.xlu0 %v1313, 64
      %v1402 = vpop.permute.xlu0 %1401
      %1403 = vrot.lane.b32.xlu0 %v1314, 64
      %v1404 = vpop.permute.xlu0 %1403
      %1405 = vrot.lane.b32.xlu0 %v1315, 64
      %v1406 = vpop.permute.xlu0 %1405
      %1407 = vrot.lane.b32.xlu0 %v1316, 64
      %v1408 = vpop.permute.xlu0 %1407
      %1409 = vrot.lane.b32.xlu0 %v1317, 64
      %v1410 = vpop.permute.xlu0 %1409
      %1411 = vrot.lane.b32.xlu0 %v1318, 64
      %v1412 = vpop.permute.xlu0 %1411
      %1413 = vrot.lane.b32.xlu0 %v1319, 64
      %v1414 = vpop.permute.xlu0 %1413
      %1415 = vrot.lane.b32.xlu0 %v1320, 64
      %v1416 = vpop.permute.xlu0 %1415
      %1433 = vrot.lane.b32.xlu0 %v1305, 96
      %v1434 = vpop.permute.xlu0 %1433
      %1435 = vrot.lane.b32.xlu0 %v1306, 96
      %v1436 = vpop.permute.xlu0 %1435
      %1437 = vrot.lane.b32.xlu0 %v1307, 96
      %v1438 = vpop.permute.xlu0 %1437
      %1439 = vrot.lane.b32.xlu0 %v1308, 96
      %v1440 = vpop.permute.xlu0 %1439
      %1441 = vrot.lane.b32.xlu0 %v1309, 96
      %v1442 = vpop.permute.xlu0 %1441
      %1443 = vrot.lane.b32.xlu0 %v1310, 96
      %v1444 = vpop.permute.xlu0 %1443
      %1445 = vrot.lane.b32.xlu0 %v1311, 96
      %v1446 = vpop.permute.xlu0 %1445
      %1447 = vrot.lane.b32.xlu0 %v1312, 96
      %v1448 = vpop.permute.xlu0 %1447
      %1449 = vrot.lane.b32.xlu0 %v1313, 96
      %v1450 = vpop.permute.xlu0 %1449
      %1451 = vrot.lane.b32.xlu0 %v1314, 96
      %v1452 = vpop.permute.xlu0 %1451
      %1453 = vrot.lane.b32.xlu0 %v1315, 96
      %v1454 = vpop.permute.xlu0 %1453
      %1455 = vrot.lane.b32.xlu0 %v1316, 96
      %v1456 = vpop.permute.xlu0 %1455
      %1457 = vrot.lane.b32.xlu0 %v1317, 96
      %v1458 = vpop.permute.xlu0 %1457
      %1459 = vrot.lane.b32.xlu0 %v1318, 96
      %v1460 = vpop.permute.xlu0 %1459
      %1461 = vrot.lane.b32.xlu0 %v1319, 96
      %v1462 = vpop.permute.xlu0 %1461
      %1463 = vrot.lane.b32.xlu0 %v1320, 96
      %v1464 = vpop.permute.xlu0 %1463
      %v1481 = vsel %vm612, %v1305, %v1338
      %v1482 = vsel %vm612, %v1306, %v1340
      %v1483 = vsel %vm612, %v1307, %v1342
      %v1484 = vsel %vm612, %v1308, %v1344
      %v1485 = vsel %vm612, %v1309, %v1346
      %v1486 = vsel %vm612, %v1310, %v1348
      %v1487 = vsel %vm612, %v1311, %v1350
      %v1488 = vsel %vm612, %v1312, %v1352
      %v1489 = vsel %vm612, %v1313, %v1354
      %v1490 = vsel %vm612, %v1314, %v1356
      %v1491 = vsel %vm612, %v1315, %v1358
      %v1492 = vsel %vm612, %v1316, %v1360
      %v1493 = vsel %vm612, %v1317, %v1362
      %v1494 = vsel %vm612, %v1318, %v1364
      %v1495 = vsel %vm612, %v1319, %v1366
      %v1496 = vsel %vm612, %v1320, %v1368
      %vm1497 = vcmask 523264
      %v1498 = vsel %vm1497, %v1481, %v1386
      %v1499 = vsel %vm1497, %v1482, %v1388
      %v1500 = vsel %vm1497, %v1483, %v1390
      %v1501 = vsel %vm1497, %v1484, %v1392
      %v1502 = vsel %vm1497, %v1485, %v1394
      %v1503 = vsel %vm1497, %v1486, %v1396
      %v1504 = vsel %vm1497, %v1487, %v1398
      %v1505 = vsel %vm1497, %v1488, %v1400
      %v1506 = vsel %vm1497, %v1489, %v1402
      %v1507 = vsel %vm1497, %v1490, %v1404
      %v1508 = vsel %vm1497, %v1491, %v1406
      %v1509 = vsel %vm1497, %v1492, %v1408
      %v1510 = vsel %vm1497, %v1493, %v1410
      %v1511 = vsel %vm1497, %v1494, %v1412
      %v1512 = vsel %vm1497, %v1495, %v1414
      %v1513 = vsel %vm1497, %v1496, %v1416
      %vm1514 = vcmask 785408
      %v1515 = vsel %vm1514, %v1498, %v1434
      %v1516 = vsel %vm1514, %v1499, %v1436
      %v1517 = vsel %vm1514, %v1500, %v1438
      %v1518 = vsel %vm1514, %v1501, %v1440
      %v1519 = vsel %vm1514, %v1502, %v1442
      %v1520 = vsel %vm1514, %v1503, %v1444
      %v1521 = vsel %vm1514, %v1504, %v1446
      %v1522 = vsel %vm1514, %v1505, %v1448
      %v1523 = vsel %vm1514, %v1506, %v1450
      %v1524 = vsel %vm1514, %v1507, %v1452
      %v1525 = vsel %vm1514, %v1508, %v1454
      %v1526 = vsel %vm1514, %v1509, %v1456
      %v1527 = vsel %vm1514, %v1510, %v1458
      %v1528 = vsel %vm1514, %v1511, %v1460
      %v1529 = vsel %vm1514, %v1512, %v1462
      %v1530 = vsel %vm1514, %v1513, %v1464
      %v1531 = vmul.f32 %v1515, %v728
      %v1532 = vmul.f32 %v1515, %v730
      %v1533 = vmul.f32 %v1515, %v889
      %v1534 = vmul.f32 %v1515, %v891
      %v1535 = vmul.f32 %v1515, %v1050
      %v1536 = vmul.f32 %v1515, %v1052
      %v1537 = vmul.f32 %v1515, %v1211
      %v1538 = vmul.f32 %v1515, %v1213
      %v1539 = vmul.f32 %v1516, %v734
      %v1540 = vmul.f32 %v1516, %v736
      %v1541 = vmul.f32 %v1516, %v895
      %v1542 = vmul.f32 %v1516, %v897
      %v1543 = vmul.f32 %v1516, %v1056
      %v1544 = vmul.f32 %v1516, %v1058
      %v1545 = vmul.f32 %v1516, %v1217
      %v1546 = vmul.f32 %v1516, %v1219
      %v1547 = vmul.f32 %v1517, %v740
      %v1548 = vmul.f32 %v1517, %v742
      %v1549 = vmul.f32 %v1517, %v901
      %v1550 = vmul.f32 %v1517, %v903
      %v1551 = vmul.f32 %v1517, %v1062
      %v1552 = vmul.f32 %v1517, %v1064
      %v1553 = vmul.f32 %v1517, %v1223
      %v1554 = vmul.f32 %v1517, %v1225
      %v1555 = vmul.f32 %v1518, %v746
      %v1556 = vmul.f32 %v1518, %v748
      %v1557 = vmul.f32 %v1518, %v907
      %v1558 = vmul.f32 %v1518, %v909
      %v1559 = vmul.f32 %v1518, %v1068
      %v1560 = vmul.f32 %v1518, %v1070
      %v1561 = vmul.f32 %v1518, %v1229
      %v1562 = vmul.f32 %v1518, %v1231
      %v1563 = vmul.f32 %v1519, %v752
      %v1564 = vmul.f32 %v1519, %v754
      %v1565 = vmul.f32 %v1519, %v913
      %v1566 = vmul.f32 %v1519, %v915
      %v1567 = vmul.f32 %v1519, %v1074
      %v1568 = vmul.f32 %v1519, %v1076
      %v1569 = vmul.f32 %v1519, %v1235
      %v1570 = vmul.f32 %v1519, %v1237
      %v1571 = vmul.f32 %v1520, %v758
      %v1572 = vmul.f32 %v1520, %v760
      %v1573 = vmul.f32 %v1520, %v919
      %v1574 = vmul.f32 %v1520, %v921
      %v1575 = vmul.f32 %v1520, %v1080
      %v1576 = vmul.f32 %v1520, %v1082
      %v1577 = vmul.f32 %v1520, %v1241
      %v1578 = vmul.f32 %v1520, %v1243
      %v1579 = vmul.f32 %v1521, %v764
      %v1580 = vmul.f32 %v1521, %v766
      %v1581 = vmul.f32 %v1521, %v925
      %v1582 = vmul.f32 %v1521, %v927
      %v1583 = vmul.f32 %v1521, %v1086
      %v1584 = vmul.f32 %v1521, %v1088
      %v1585 = vmul.f32 %v1521, %v1247
      %v1586 = vmul.f32 %v1521, %v1249
      %v1587 = vmul.f32 %v1522, %v770
      %v1588 = vmul.f32 %v1522, %v772
      %v1589 = vmul.f32 %v1522, %v931
      %v1590 = vmul.f32 %v1522, %v933
      %v1591 = vmul.f32 %v1522, %v1092
      %v1592 = vmul.f32 %v1522, %v1094
      %v1593 = vmul.f32 %v1522, %v1253
      %v1594 = vmul.f32 %v1522, %v1255
      %v1595 = vmul.f32 %v1523, %v776
      %v1596 = vmul.f32 %v1523, %v778
      %v1597 = vmul.f32 %v1523, %v937
      %v1598 = vmul.f32 %v1523, %v939
      %v1599 = vmul.f32 %v1523, %v1098
      %v1600 = vmul.f32 %v1523, %v1100
      %v1601 = vmul.f32 %v1523, %v1259
      %v1602 = vmul.f32 %v1523, %v1261
      %v1603 = vmul.f32 %v1524, %v782
      %v1604 = vmul.f32 %v1524, %v784
      %v1605 = vmul.f32 %v1524, %v943
      %v1606 = vmul.f32 %v1524, %v945
      %v1607 = vmul.f32 %v1524, %v1104
      %v1608 = vmul.f32 %v1524, %v1106
      %v1609 = vmul.f32 %v1524, %v1265
      %v1610 = vmul.f32 %v1524, %v1267
      %v1611 = vmul.f32 %v1525, %v788
      %v1612 = vmul.f32 %v1525, %v790
      %v1613 = vmul.f32 %v1525, %v949
      %v1614 = vmul.f32 %v1525, %v951
      %v1615 = vmul.f32 %v1525, %v1110
      %v1616 = vmul.f32 %v1525, %v1112
      %v1617 = vmul.f32 %v1525, %v1271
      %v1618 = vmul.f32 %v1525, %v1273
      %v1619 = vmul.f32 %v1526, %v794
      %v1620 = vmul.f32 %v1526, %v796
      %v1621 = vmul.f32 %v1526, %v955
      %v1622 = vmul.f32 %v1526, %v957
      %v1623 = vmul.f32 %v1526, %v1116
      %v1624 = vmul.f32 %v1526, %v1118
      %v1625 = vmul.f32 %v1526, %v1277
      %v1626 = vmul.f32 %v1526, %v1279
      %v1627 = vmul.f32 %v1527, %v800
      %v1628 = vmul.f32 %v1527, %v802
      %v1629 = vmul.f32 %v1527, %v961
      %v1630 = vmul.f32 %v1527, %v963
      %v1631 = vmul.f32 %v1527, %v1122
      %v1632 = vmul.f32 %v1527, %v1124
      %v1633 = vmul.f32 %v1527, %v1283
      %v1634 = vmul.f32 %v1527, %v1285
      %v1635 = vmul.f32 %v1528, %v806
      %v1636 = vmul.f32 %v1528, %v808
      %v1637 = vmul.f32 %v1528, %v967
      %v1638 = vmul.f32 %v1528, %v969
      %v1639 = vmul.f32 %v1528, %v1128
      %v1640 = vmul.f32 %v1528, %v1130
      %v1641 = vmul.f32 %v1528, %v1289
      %v1642 = vmul.f32 %v1528, %v1291
      %v1643 = vmul.f32 %v1529, %v812
      %v1644 = vmul.f32 %v1529, %v814
      %v1645 = vmul.f32 %v1529, %v973
      %v1646 = vmul.f32 %v1529, %v975
      %v1647 = vmul.f32 %v1529, %v1134
      %v1648 = vmul.f32 %v1529, %v1136
      %v1649 = vmul.f32 %v1529, %v1295
      %v1650 = vmul.f32 %v1529, %v1297
      %v1651 = vmul.f32 %v1530, %v818
      %v1652 = vmul.f32 %v1530, %v820
      %v1653 = vmul.f32 %v1530, %v979
      %v1654 = vmul.f32 %v1530, %v981
      %v1655 = vmul.f32 %v1530, %v1140
      %v1656 = vmul.f32 %v1530, %v1142
      %v1657 = vmul.f32 %v1530, %v1301
      %v1658 = vmul.f32 %v1530, %v1303
      %v1659 = vld [vmem:[%s6] sm:$0xff]
      %v1660 = vld [vmem:[%s6 + $0x8] sm:$0xff]
      %v1661 = vld [vmem:[%s6 + $0x10] sm:$0xff]
      %v1662 = vld [vmem:[%s6 + $0x18] sm:$0xff]
      %v1663 = vld [vmem:[%s6 + $0x20] sm:$0xff]
      %v1664 = vld [vmem:[%s6 + $0x28] sm:$0xff]
      %v1665 = vld [vmem:[%s6 + $0x30] sm:$0xff]
      %v1666 = vld [vmem:[%s6 + $0x38] sm:$0xff]
      %v1667 = vld [vmem:[%s6 + $0x40] sm:$0xff]
      %v1668 = vld [vmem:[%s6 + $0x48] sm:$0xff]
      %v1669 = vld [vmem:[%s6 + $0x50] sm:$0xff]
      %v1670 = vld [vmem:[%s6 + $0x58] sm:$0xff]
      %v1671 = vld [vmem:[%s6 + $0x60] sm:$0xff]
      %v1672 = vld [vmem:[%s6 + $0x68] sm:$0xff]
      %v1673 = vld [vmem:[%s6 + $0x70] sm:$0xff]
      %v1674 = vld [vmem:[%s6 + $0x78] sm:$0xff]
      %v1675 = vld [vmem:[%s6 + $0x80] sm:$0xff]
      %v1676 = vld [vmem:[%s6 + $0x88] sm:$0xff]
      %v1677 = vld [vmem:[%s6 + $0x90] sm:$0xff]
      %v1678 = vld [vmem:[%s6 + $0x98] sm:$0xff]
      %v1679 = vld [vmem:[%s6 + $0xa0] sm:$0xff]
      %v1680 = vld [vmem:[%s6 + $0xa8] sm:$0xff]
      %v1681 = vld [vmem:[%s6 + $0xb0] sm:$0xff]
      %v1682 = vld [vmem:[%s6 + $0xb8] sm:$0xff]
      %v1683 = vld [vmem:[%s6 + $0xc0] sm:$0xff]
      %v1684 = vld [vmem:[%s6 + $0xc8] sm:$0xff]
      %v1685 = vld [vmem:[%s6 + $0xd0] sm:$0xff]
      %v1686 = vld [vmem:[%s6 + $0xd8] sm:$0xff]
      %v1687 = vld [vmem:[%s6 + $0xe0] sm:$0xff]
      %v1688 = vld [vmem:[%s6 + $0xe8] sm:$0xff]
      %v1689 = vld [vmem:[%s6 + $0xf0] sm:$0xff]
      %v1690 = vld [vmem:[%s6 + $0xf8] sm:$0xff]
      %v1691 = vld [vmem:[%s6 + $0x100] sm:$0xff]
      %v1692 = vld [vmem:[%s6 + $0x108] sm:$0xff]
      %v1693 = vld [vmem:[%s6 + $0x110] sm:$0xff]
      %v1694 = vld [vmem:[%s6 + $0x118] sm:$0xff]
      %v1695 = vld [vmem:[%s6 + $0x120] sm:$0xff]
      %v1696 = vld [vmem:[%s6 + $0x128] sm:$0xff]
      %v1697 = vld [vmem:[%s6 + $0x130] sm:$0xff]
      %v1698 = vld [vmem:[%s6 + $0x138] sm:$0xff]
      %v1699 = vld [vmem:[%s6 + $0x140] sm:$0xff]
      %v1700 = vld [vmem:[%s6 + $0x148] sm:$0xff]
      %v1701 = vld [vmem:[%s6 + $0x150] sm:$0xff]
      %v1702 = vld [vmem:[%s6 + $0x158] sm:$0xff]
      %v1703 = vld [vmem:[%s6 + $0x160] sm:$0xff]
      %v1704 = vld [vmem:[%s6 + $0x168] sm:$0xff]
      %v1705 = vld [vmem:[%s6 + $0x170] sm:$0xff]
      %v1706 = vld [vmem:[%s6 + $0x178] sm:$0xff]
      %v1707 = vld [vmem:[%s6 + $0x180] sm:$0xff]
      %v1708 = vld [vmem:[%s6 + $0x188] sm:$0xff]
      %v1709 = vld [vmem:[%s6 + $0x190] sm:$0xff]
      %v1710 = vld [vmem:[%s6 + $0x198] sm:$0xff]
      %v1711 = vld [vmem:[%s6 + $0x1a0] sm:$0xff]
      %v1712 = vld [vmem:[%s6 + $0x1a8] sm:$0xff]
      %v1713 = vld [vmem:[%s6 + $0x1b0] sm:$0xff]
      %v1714 = vld [vmem:[%s6 + $0x1b8] sm:$0xff]
      %v1715 = vld [vmem:[%s6 + $0x1c0] sm:$0xff]
      %v1716 = vld [vmem:[%s6 + $0x1c8] sm:$0xff]
      %v1717 = vld [vmem:[%s6 + $0x1d0] sm:$0xff]
      %v1718 = vld [vmem:[%s6 + $0x1d8] sm:$0xff]
      %v1719 = vld [vmem:[%s6 + $0x1e0] sm:$0xff]
      %v1720 = vld [vmem:[%s6 + $0x1e8] sm:$0xff]
      %v1721 = vld [vmem:[%s6 + $0x1f0] sm:$0xff]
      %v1722 = vld [vmem:[%s6 + $0x1f8] sm:$0xff]
      %v1723 = vld [vmem:[%s6 + $0x200] sm:$0xff]
      %v1724 = vld [vmem:[%s6 + $0x208] sm:$0xff]
      %v1725 = vld [vmem:[%s6 + $0x210] sm:$0xff]
      %v1726 = vld [vmem:[%s6 + $0x218] sm:$0xff]
      %v1727 = vld [vmem:[%s6 + $0x220] sm:$0xff]
      %v1728 = vld [vmem:[%s6 + $0x228] sm:$0xff]
      %v1729 = vld [vmem:[%s6 + $0x230] sm:$0xff]
      %v1730 = vld [vmem:[%s6 + $0x238] sm:$0xff]
      %v1731 = vld [vmem:[%s6 + $0x240] sm:$0xff]
      %v1732 = vld [vmem:[%s6 + $0x248] sm:$0xff]
      %v1733 = vld [vmem:[%s6 + $0x250] sm:$0xff]
      %v1734 = vld [vmem:[%s6 + $0x258] sm:$0xff]
      %v1735 = vld [vmem:[%s6 + $0x260] sm:$0xff]
      %v1736 = vld [vmem:[%s6 + $0x268] sm:$0xff]
      %v1737 = vld [vmem:[%s6 + $0x270] sm:$0xff]
      %v1738 = vld [vmem:[%s6 + $0x278] sm:$0xff]
      %v1739 = vld [vmem:[%s6 + $0x280] sm:$0xff]
      %v1740 = vld [vmem:[%s6 + $0x288] sm:$0xff]
      %v1741 = vld [vmem:[%s6 + $0x290] sm:$0xff]
      %v1742 = vld [vmem:[%s6 + $0x298] sm:$0xff]
      %v1743 = vld [vmem:[%s6 + $0x2a0] sm:$0xff]
      %v1744 = vld [vmem:[%s6 + $0x2a8] sm:$0xff]
      %v1745 = vld [vmem:[%s6 + $0x2b0] sm:$0xff]
      %v1746 = vld [vmem:[%s6 + $0x2b8] sm:$0xff]
      %v1747 = vld [vmem:[%s6 + $0x2c0] sm:$0xff]
      %v1748 = vld [vmem:[%s6 + $0x2c8] sm:$0xff]
      %v1749 = vld [vmem:[%s6 + $0x2d0] sm:$0xff]
      %v1750 = vld [vmem:[%s6 + $0x2d8] sm:$0xff]
      %v1751 = vld [vmem:[%s6 + $0x2e0] sm:$0xff]
      %v1752 = vld [vmem:[%s6 + $0x2e8] sm:$0xff]
      %v1753 = vld [vmem:[%s6 + $0x2f0] sm:$0xff]
      %v1754 = vld [vmem:[%s6 + $0x2f8] sm:$0xff]
      %v1755 = vld [vmem:[%s6 + $0x300] sm:$0xff]
      %v1756 = vld [vmem:[%s6 + $0x308] sm:$0xff]
      %v1757 = vld [vmem:[%s6 + $0x310] sm:$0xff]
      %v1758 = vld [vmem:[%s6 + $0x318] sm:$0xff]
      %v1759 = vld [vmem:[%s6 + $0x320] sm:$0xff]
      %v1760 = vld [vmem:[%s6 + $0x328] sm:$0xff]
      %v1761 = vld [vmem:[%s6 + $0x330] sm:$0xff]
      %v1762 = vld [vmem:[%s6 + $0x338] sm:$0xff]
      %v1763 = vld [vmem:[%s6 + $0x340] sm:$0xff]
      %v1764 = vld [vmem:[%s6 + $0x348] sm:$0xff]
      %v1765 = vld [vmem:[%s6 + $0x350] sm:$0xff]
      %v1766 = vld [vmem:[%s6 + $0x358] sm:$0xff]
      %v1767 = vld [vmem:[%s6 + $0x360] sm:$0xff]
      %v1768 = vld [vmem:[%s6 + $0x368] sm:$0xff]
      %v1769 = vld [vmem:[%s6 + $0x370] sm:$0xff]
      %v1770 = vld [vmem:[%s6 + $0x378] sm:$0xff]
      %v1771 = vld [vmem:[%s6 + $0x380] sm:$0xff]
      %v1772 = vld [vmem:[%s6 + $0x388] sm:$0xff]
      %v1773 = vld [vmem:[%s6 + $0x390] sm:$0xff]
      %v1774 = vld [vmem:[%s6 + $0x398] sm:$0xff]
      %v1775 = vld [vmem:[%s6 + $0x3a0] sm:$0xff]
      %v1776 = vld [vmem:[%s6 + $0x3a8] sm:$0xff]
      %v1777 = vld [vmem:[%s6 + $0x3b0] sm:$0xff]
      %v1778 = vld [vmem:[%s6 + $0x3b8] sm:$0xff]
      %v1779 = vld [vmem:[%s6 + $0x3c0] sm:$0xff]
      %v1780 = vld [vmem:[%s6 + $0x3c8] sm:$0xff]
      %v1781 = vld [vmem:[%s6 + $0x3d0] sm:$0xff]
      %v1782 = vld [vmem:[%s6 + $0x3d8] sm:$0xff]
      %v1783 = vld [vmem:[%s6 + $0x3e0] sm:$0xff]
      %v1784 = vld [vmem:[%s6 + $0x3e8] sm:$0xff]
      %v1785 = vld [vmem:[%s6 + $0x3f0] sm:$0xff]
      %v1786 = vld [vmem:[%s6 + $0x3f8] sm:$0xff]
      %1787 = vmatprep.subr.mxu0 0.0
      %1788 = vmatpush1.msra.mxu0 %v1674
      %1789 = vmatprep.subr.mxu0 0.0
      %1790 = vmatpush1.msra.mxu0 %v1673
      %1791 = vmatprep.subr.mxu0 0.0
      %1792 = vmatpush1.msra.mxu0 %v1672
      %1793 = vmatprep.subr.mxu0 0.0
      %1794 = vmatpush1.msra.mxu0 %v1671
      %1795 = vmatprep.subr.mxu0 0.0
      %1796 = vmatpush1.msra.mxu0 %v1670
      %1797 = vmatprep.subr.mxu0 0.0
      %1798 = vmatpush1.msra.mxu0 %v1669
      %1799 = vmatprep.subr.mxu0 0.0
      %1800 = vmatpush1.msra.mxu0 %v1668
      %1801 = vmatprep.subr.mxu0 0.0
      %1802 = vmatpush1.msra.mxu0 %v1667
      %1803 = vmatprep.subr.mxu0 0.0
      %1804 = vmatpush1.msra.mxu0 %v1666
      %1805 = vmatprep.subr.mxu0 0.0
      %1806 = vmatpush1.msra.mxu0 %v1665
      %1807 = vmatprep.subr.mxu0 0.0
      %1808 = vmatpush1.msra.mxu0 %v1664
      %1809 = vmatprep.subr.mxu0 0.0
      %1810 = vmatpush1.msra.mxu0 %v1663
      %1811 = vmatprep.subr.mxu0 0.0
      %1812 = vmatpush1.msra.mxu0 %v1662
      %1813 = vmatprep.subr.mxu0 0.0
      %1814 = vmatpush1.msra.mxu0 %v1661
      %1815 = vmatprep.subr.mxu0 0.0
      %1816 = vmatpush1.msra.mxu0 %v1660
      %1817 = vmatprep.subr.mxu0 0.0
      %1818 = vmatpush1.msra.mxu0 %v1659
      %1819 = vmatprep.subr.mxu0 0.0
      %1820 = vmatpush2.msra.mxu0 %v1690
      %1821 = vmatprep.subr.mxu0 0.0
      %1822 = vmatpush2.msra.mxu0 %v1689
      %1823 = vmatprep.subr.mxu0 0.0
      %1824 = vmatpush2.msra.mxu0 %v1688
      %1825 = vmatprep.subr.mxu0 0.0
      %1826 = vmatpush2.msra.mxu0 %v1687
      %1827 = vmatprep.subr.mxu0 0.0
      %1828 = vmatpush2.msra.mxu0 %v1686
      %1829 = vmatprep.subr.mxu0 0.0
      %1830 = vmatpush2.msra.mxu0 %v1685
      %1831 = vmatprep.subr.mxu0 0.0
      %1832 = vmatpush2.msra.mxu0 %v1684
      %1833 = vmatprep.subr.mxu0 0.0
      %1834 = vmatpush2.msra.mxu0 %v1683
      %1835 = vmatprep.subr.mxu0 0.0
      %1836 = vmatpush2.msra.mxu0 %v1682
      %1837 = vmatprep.subr.mxu0 0.0
      %1838 = vmatpush2.msra.mxu0 %v1681
      %1839 = vmatprep.subr.mxu0 0.0
      %1840 = vmatpush2.msra.mxu0 %v1680
      %1841 = vmatprep.subr.mxu0 0.0
      %1842 = vmatpush2.msra.mxu0 %v1679
      %1843 = vmatprep.subr.mxu0 0.0
      %1844 = vmatpush2.msra.mxu0 %v1678
      %1845 = vmatprep.subr.mxu0 0.0
      %1846 = vmatpush2.msra.mxu0 %v1677
      %1847 = vmatprep.subr.mxu0 0.0
      %1848 = vmatpush2.msra.mxu0 %v1676
      %1849 = vmatprep.subr.mxu0 0.0
      %1850 = vmatpush2.msra.mxu0 %v1675
      %1851 = vmatprep.mubr.f32.mxu0 %v1532
      %1852 = vmatmul.mubr.f32.gmra.mxu0 %v1531
      %v1853 = vpop.f32.mrf.mxu0
      %v1854 = vadd.f32 0.0, %v1853
      %v1855 = vpop.f32.mrf.mxu0
      %1856 = vmatprep.mubr.f32.mxu0 %v1540
      %1857 = vmatmul.mubr.f32.gmra.mxu0 %v1539
      %v1858 = vpop.f32.mrf.mxu0
      %v1859 = vadd.f32 0.0, %v1858
      %v1860 = vpop.f32.mrf.mxu0
      %1861 = vmatprep.mubr.f32.mxu0 %v1548
      %1862 = vmatmul.mubr.f32.gmra.mxu0 %v1547
      %v1863 = vpop.f32.mrf.mxu0
      %v1864 = vadd.f32 0.0, %v1863
      %v1865 = vpop.f32.mrf.mxu0
      %1866 = vmatprep.mubr.f32.mxu0 %v1556
      %1867 = vmatmul.mubr.f32.gmra.mxu0 %v1555
      %v1868 = vpop.f32.mrf.mxu0
      %v1869 = vadd.f32 0.0, %v1868
      %v1870 = vpop.f32.mrf.mxu0
      %1871 = vmatprep.mubr.f32.mxu0 %v1564
      %1872 = vmatmul.mubr.f32.gmra.mxu0 %v1563
      %v1873 = vpop.f32.mrf.mxu0
      %v1874 = vadd.f32 0.0, %v1873
      %v1875 = vpop.f32.mrf.mxu0
      %1876 = vmatprep.mubr.f32.mxu0 %v1572
      %1877 = vmatmul.mubr.f32.gmra.mxu0 %v1571
      %v1878 = vpop.f32.mrf.mxu0
      %v1879 = vadd.f32 0.0, %v1878
      %v1880 = vpop.f32.mrf.mxu0
      %1881 = vmatprep.mubr.f32.mxu0 %v1580
      %1882 = vmatmul.mubr.f32.gmra.mxu0 %v1579
      %v1883 = vpop.f32.mrf.mxu0
      %v1884 = vadd.f32 0.0, %v1883
      %v1885 = vpop.f32.mrf.mxu0
      %1886 = vmatprep.mubr.f32.mxu0 %v1588
      %1887 = vmatmul.mubr.f32.gmra.mxu0 %v1587
      %v1888 = vpop.f32.mrf.mxu0
      %v1889 = vadd.f32 0.0, %v1888
      %v1890 = vpop.f32.mrf.mxu0
      %1891 = vmatprep.mubr.f32.mxu0 %v1596
      %1892 = vmatmul.mubr.f32.gmra.mxu0 %v1595
      %v1893 = vpop.f32.mrf.mxu0
      %v1894 = vadd.f32 0.0, %v1893
      %v1895 = vpop.f32.mrf.mxu0
      %1896 = vmatprep.mubr.f32.mxu0 %v1604
      %1897 = vmatmul.mubr.f32.gmra.mxu0 %v1603
      %v1898 = vpop.f32.mrf.mxu0
      %v1899 = vadd.f32 0.0, %v1898
      %v1900 = vpop.f32.mrf.mxu0
      %1901 = vmatprep.mubr.f32.mxu0 %v1612
      %1902 = vmatmul.mubr.f32.gmra.mxu0 %v1611
      %v1903 = vpop.f32.mrf.mxu0
      %v1904 = vadd.f32 0.0, %v1903
      %v1905 = vpop.f32.mrf.mxu0
      %1906 = vmatprep.mubr.f32.mxu0 %v1620
      %1907 = vmatmul.mubr.f32.gmra.mxu0 %v1619
      %v1908 = vpop.f32.mrf.mxu0
      %v1909 = vadd.f32 0.0, %v1908
      %v1910 = vpop.f32.mrf.mxu0
      %1911 = vmatprep.mubr.f32.mxu0 %v1628
      %1912 = vmatmul.mubr.f32.gmra.mxu0 %v1627
      %v1913 = vpop.f32.mrf.mxu0
      %v1914 = vadd.f32 0.0, %v1913
      %v1915 = vpop.f32.mrf.mxu0
      %1916 = vmatprep.mubr.f32.mxu0 %v1636
      %1917 = vmatmul.mubr.f32.gmra.mxu0 %v1635
      %v1918 = vpop.f32.mrf.mxu0
      %v1919 = vadd.f32 0.0, %v1918
      %v1920 = vpop.f32.mrf.mxu0
      %1921 = vmatprep.mubr.f32.mxu0 %v1644
      %1922 = vmatmul.mubr.f32.gmra.mxu0 %v1643
      %v1923 = vpop.f32.mrf.mxu0
      %v1924 = vadd.f32 0.0, %v1923
      %v1925 = vpop.f32.mrf.mxu0
      %1926 = vmatprep.mubr.f32.mxu0 %v1652
      %1927 = vmatmul.mubr.f32.gmra.mxu0 %v1651
      %v1928 = vpop.f32.mrf.mxu0
      %v1929 = vadd.f32 0.0, %v1928
      %v1930 = vpop.f32.mrf.mxu0
      %1931 = vdwg.mxu0
      %1932 = vmatprep.subr.mxu0 0.0
      %1933 = vmatpush1.msra.mxu0 %v1706
      %1934 = vmatprep.subr.mxu0 0.0
      %1935 = vmatpush1.msra.mxu0 %v1705
      %1936 = vmatprep.subr.mxu0 0.0
      %1937 = vmatpush1.msra.mxu0 %v1704
      %1938 = vmatprep.subr.mxu0 0.0
      %1939 = vmatpush1.msra.mxu0 %v1703
      %1940 = vmatprep.subr.mxu0 0.0
      %1941 = vmatpush1.msra.mxu0 %v1702
      %1942 = vmatprep.subr.mxu0 0.0
      %1943 = vmatpush1.msra.mxu0 %v1701
      %1944 = vmatprep.subr.mxu0 0.0
      %1945 = vmatpush1.msra.mxu0 %v1700
      %1946 = vmatprep.subr.mxu0 0.0
      %1947 = vmatpush1.msra.mxu0 %v1699
      %1948 = vmatprep.subr.mxu0 0.0
      %1949 = vmatpush1.msra.mxu0 %v1698
      %1950 = vmatprep.subr.mxu0 0.0
      %1951 = vmatpush1.msra.mxu0 %v1697
      %1952 = vmatprep.subr.mxu0 0.0
      %1953 = vmatpush1.msra.mxu0 %v1696
      %1954 = vmatprep.subr.mxu0 0.0
      %1955 = vmatpush1.msra.mxu0 %v1695
      %1956 = vmatprep.subr.mxu0 0.0
      %1957 = vmatpush1.msra.mxu0 %v1694
      %1958 = vmatprep.subr.mxu0 0.0
      %1959 = vmatpush1.msra.mxu0 %v1693
      %1960 = vmatprep.subr.mxu0 0.0
      %1961 = vmatpush1.msra.mxu0 %v1692
      %1962 = vmatprep.subr.mxu0 0.0
      %1963 = vmatpush1.msra.mxu0 %v1691
      %1964 = vmatprep.subr.mxu0 0.0
      %1965 = vmatpush2.msra.mxu0 %v1722
      %1966 = vmatprep.subr.mxu0 0.0
      %1967 = vmatpush2.msra.mxu0 %v1721
      %1968 = vmatprep.subr.mxu0 0.0
      %1969 = vmatpush2.msra.mxu0 %v1720
      %1970 = vmatprep.subr.mxu0 0.0
      %1971 = vmatpush2.msra.mxu0 %v1719
      %1972 = vmatprep.subr.mxu0 0.0
      %1973 = vmatpush2.msra.mxu0 %v1718
      %1974 = vmatprep.subr.mxu0 0.0
      %1975 = vmatpush2.msra.mxu0 %v1717
      %1976 = vmatprep.subr.mxu0 0.0
      %1977 = vmatpush2.msra.mxu0 %v1716
      %1978 = vmatprep.subr.mxu0 0.0
      %1979 = vmatpush2.msra.mxu0 %v1715
      %1980 = vmatprep.subr.mxu0 0.0
      %1981 = vmatpush2.msra.mxu0 %v1714
      %1982 = vmatprep.subr.mxu0 0.0
      %1983 = vmatpush2.msra.mxu0 %v1713
      %1984 = vmatprep.subr.mxu0 0.0
      %1985 = vmatpush2.msra.mxu0 %v1712
      %1986 = vmatprep.subr.mxu0 0.0
      %1987 = vmatpush2.msra.mxu0 %v1711
      %1988 = vmatprep.subr.mxu0 0.0
      %1989 = vmatpush2.msra.mxu0 %v1710
      %1990 = vmatprep.subr.mxu0 0.0
      %1991 = vmatpush2.msra.mxu0 %v1709
      %1992 = vmatprep.subr.mxu0 0.0
      %1993 = vmatpush2.msra.mxu0 %v1708
      %1994 = vmatprep.subr.mxu0 0.0
      %1995 = vmatpush2.msra.mxu0 %v1707
      %1996 = vmatprep.mubr.f32.mxu0 %v1534
      %1997 = vmatmul.mubr.f32.gmra.mxu0 %v1533
      %v1998 = vpop.f32.mrf.mxu0
      %v1999 = vadd.f32 %v1854, %v1998
      %v2000 = vpop.f32.mrf.mxu0
      %2001 = vmatprep.mubr.f32.mxu0 %v1542
      %2002 = vmatmul.mubr.f32.gmra.mxu0 %v1541
      %v2003 = vpop.f32.mrf.mxu0
      %v2004 = vadd.f32 %v1859, %v2003
      %v2005 = vpop.f32.mrf.mxu0
      %2006 = vmatprep.mubr.f32.mxu0 %v1550
      %2007 = vmatmul.mubr.f32.gmra.mxu0 %v1549
      %v2008 = vpop.f32.mrf.mxu0
      %v2009 = vadd.f32 %v1864, %v2008
      %v2010 = vpop.f32.mrf.mxu0
      %2011 = vmatprep.mubr.f32.mxu0 %v1558
      %2012 = vmatmul.mubr.f32.gmra.mxu0 %v1557
      %v2013 = vpop.f32.mrf.mxu0
      %v2014 = vadd.f32 %v1869, %v2013
      %v2015 = vpop.f32.mrf.mxu0
      %2016 = vmatprep.mubr.f32.mxu0 %v1566
      %2017 = vmatmul.mubr.f32.gmra.mxu0 %v1565
      %v2018 = vpop.f32.mrf.mxu0
      %v2019 = vadd.f32 %v1874, %v2018
      %v2020 = vpop.f32.mrf.mxu0
      %2021 = vmatprep.mubr.f32.mxu0 %v1574
      %2022 = vmatmul.mubr.f32.gmra.mxu0 %v1573
      %v2023 = vpop.f32.mrf.mxu0
      %v2024 = vadd.f32 %v1879, %v2023
      %v2025 = vpop.f32.mrf.mxu0
      %2026 = vmatprep.mubr.f32.mxu0 %v1582
      %2027 = vmatmul.mubr.f32.gmra.mxu0 %v1581
      %v2028 = vpop.f32.mrf.mxu0
      %v2029 = vadd.f32 %v1884, %v2028
      %v2030 = vpop.f32.mrf.mxu0
      %2031 = vmatprep.mubr.f32.mxu0 %v1590
      %2032 = vmatmul.mubr.f32.gmra.mxu0 %v1589
      %v2033 = vpop.f32.mrf.mxu0
      %v2034 = vadd.f32 %v1889, %v2033
      %v2035 = vpop.f32.mrf.mxu0
      %2036 = vmatprep.mubr.f32.mxu0 %v1598
      %2037 = vmatmul.mubr.f32.gmra.mxu0 %v1597
      %v2038 = vpop.f32.mrf.mxu0
      %v2039 = vadd.f32 %v1894, %v2038
      %v2040 = vpop.f32.mrf.mxu0
      %2041 = vmatprep.mubr.f32.mxu0 %v1606
      %2042 = vmatmul.mubr.f32.gmra.mxu0 %v1605
      %v2043 = vpop.f32.mrf.mxu0
      %v2044 = vadd.f32 %v1899, %v2043
      %v2045 = vpop.f32.mrf.mxu0
      %2046 = vmatprep.mubr.f32.mxu0 %v1614
      %2047 = vmatmul.mubr.f32.gmra.mxu0 %v1613
      %v2048 = vpop.f32.mrf.mxu0
      %v2049 = vadd.f32 %v1904, %v2048
      %v2050 = vpop.f32.mrf.mxu0
      %2051 = vmatprep.mubr.f32.mxu0 %v1622
      %2052 = vmatmul.mubr.f32.gmra.mxu0 %v1621
      %v2053 = vpop.f32.mrf.mxu0
      %v2054 = vadd.f32 %v1909, %v2053
      %v2055 = vpop.f32.mrf.mxu0
      %2056 = vmatprep.mubr.f32.mxu0 %v1630
      %2057 = vmatmul.mubr.f32.gmra.mxu0 %v1629
      %v2058 = vpop.f32.mrf.mxu0
      %v2059 = vadd.f32 %v1914, %v2058
      %v2060 = vpop.f32.mrf.mxu0
      %2061 = vmatprep.mubr.f32.mxu0 %v1638
      %2062 = vmatmul.mubr.f32.gmra.mxu0 %v1637
      %v2063 = vpop.f32.mrf.mxu0
      %v2064 = vadd.f32 %v1919, %v2063
      %v2065 = vpop.f32.mrf.mxu0
      %2066 = vmatprep.mubr.f32.mxu0 %v1646
      %2067 = vmatmul.mubr.f32.gmra.mxu0 %v1645
      %v2068 = vpop.f32.mrf.mxu0
      %v2069 = vadd.f32 %v1924, %v2068
      %v2070 = vpop.f32.mrf.mxu0
      %2071 = vmatprep.mubr.f32.mxu0 %v1654
      %2072 = vmatmul.mubr.f32.gmra.mxu0 %v1653
      %v2073 = vpop.f32.mrf.mxu0
      %v2074 = vadd.f32 %v1929, %v2073
      %v2075 = vpop.f32.mrf.mxu0
      %2076 = vdwg.mxu0
      %2077 = vmatprep.subr.mxu0 0.0
      %2078 = vmatpush1.msra.mxu0 %v1738
      %2079 = vmatprep.subr.mxu0 0.0
      %2080 = vmatpush1.msra.mxu0 %v1737
      %2081 = vmatprep.subr.mxu0 0.0
      %2082 = vmatpush1.msra.mxu0 %v1736
      %2083 = vmatprep.subr.mxu0 0.0
      %2084 = vmatpush1.msra.mxu0 %v1735
      %2085 = vmatprep.subr.mxu0 0.0
      %2086 = vmatpush1.msra.mxu0 %v1734
      %2087 = vmatprep.subr.mxu0 0.0
      %2088 = vmatpush1.msra.mxu0 %v1733
      %2089 = vmatprep.subr.mxu0 0.0
      %2090 = vmatpush1.msra.mxu0 %v1732
      %2091 = vmatprep.subr.mxu0 0.0
      %2092 = vmatpush1.msra.mxu0 %v1731
      %2093 = vmatprep.subr.mxu0 0.0
      %2094 = vmatpush1.msra.mxu0 %v1730
      %2095 = vmatprep.subr.mxu0 0.0
      %2096 = vmatpush1.msra.mxu0 %v1729
      %2097 = vmatprep.subr.mxu0 0.0
      %2098 = vmatpush1.msra.mxu0 %v1728
      %2099 = vmatprep.subr.mxu0 0.0
      %2100 = vmatpush1.msra.mxu0 %v1727
      %2101 = vmatprep.subr.mxu0 0.0
      %2102 = vmatpush1.msra.mxu0 %v1726
      %2103 = vmatprep.subr.mxu0 0.0
      %2104 = vmatpush1.msra.mxu0 %v1725
      %2105 = vmatprep.subr.mxu0 0.0
      %2106 = vmatpush1.msra.mxu0 %v1724
      %2107 = vmatprep.subr.mxu0 0.0
      %2108 = vmatpush1.msra.mxu0 %v1723
      %2109 = vmatprep.subr.mxu0 0.0
      %2110 = vmatpush2.msra.mxu0 %v1754
      %2111 = vmatprep.subr.mxu0 0.0
      %2112 = vmatpush2.msra.mxu0 %v1753
      %2113 = vmatprep.subr.mxu0 0.0
      %2114 = vmatpush2.msra.mxu0 %v1752
      %2115 = vmatprep.subr.mxu0 0.0
      %2116 = vmatpush2.msra.mxu0 %v1751
      %2117 = vmatprep.subr.mxu0 0.0
      %2118 = vmatpush2.msra.mxu0 %v1750
      %2119 = vmatprep.subr.mxu0 0.0
      %2120 = vmatpush2.msra.mxu0 %v1749
      %2121 = vmatprep.subr.mxu0 0.0
      %2122 = vmatpush2.msra.mxu0 %v1748
      %2123 = vmatprep.subr.mxu0 0.0
      %2124 = vmatpush2.msra.mxu0 %v1747
      %2125 = vmatprep.subr.mxu0 0.0
      %2126 = vmatpush2.msra.mxu0 %v1746
      %2127 = vmatprep.subr.mxu0 0.0
      %2128 = vmatpush2.msra.mxu0 %v1745
      %2129 = vmatprep.subr.mxu0 0.0
      %2130 = vmatpush2.msra.mxu0 %v1744
      %2131 = vmatprep.subr.mxu0 0.0
      %2132 = vmatpush2.msra.mxu0 %v1743
      %2133 = vmatprep.subr.mxu0 0.0
      %2134 = vmatpush2.msra.mxu0 %v1742
      %2135 = vmatprep.subr.mxu0 0.0
      %2136 = vmatpush2.msra.mxu0 %v1741
      %2137 = vmatprep.subr.mxu0 0.0
      %2138 = vmatpush2.msra.mxu0 %v1740
      %2139 = vmatprep.subr.mxu0 0.0
      %2140 = vmatpush2.msra.mxu0 %v1739
      %2141 = vmatprep.mubr.f32.mxu0 %v1536
      %2142 = vmatmul.mubr.f32.gmra.mxu0 %v1535
      %v2143 = vpop.f32.mrf.mxu0
      %v2144 = vadd.f32 %v1999, %v2143
      %v2145 = vpop.f32.mrf.mxu0
      %2146 = vmatprep.mubr.f32.mxu0 %v1544
      %2147 = vmatmul.mubr.f32.gmra.mxu0 %v1543
      %v2148 = vpop.f32.mrf.mxu0
      %v2149 = vadd.f32 %v2004, %v2148
      %v2150 = vpop.f32.mrf.mxu0
      %2151 = vmatprep.mubr.f32.mxu0 %v1552
      %2152 = vmatmul.mubr.f32.gmra.mxu0 %v1551
      %v2153 = vpop.f32.mrf.mxu0
      %v2154 = vadd.f32 %v2009, %v2153
      %v2155 = vpop.f32.mrf.mxu0
      %2156 = vmatprep.mubr.f32.mxu0 %v1560
      %2157 = vmatmul.mubr.f32.gmra.mxu0 %v1559
      %v2158 = vpop.f32.mrf.mxu0
      %v2159 = vadd.f32 %v2014, %v2158
      %v2160 = vpop.f32.mrf.mxu0
      %2161 = vmatprep.mubr.f32.mxu0 %v1568
      %2162 = vmatmul.mubr.f32.gmra.mxu0 %v1567
      %v2163 = vpop.f32.mrf.mxu0
      %v2164 = vadd.f32 %v2019, %v2163
      %v2165 = vpop.f32.mrf.mxu0
      %2166 = vmatprep.mubr.f32.mxu0 %v1576
      %2167 = vmatmul.mubr.f32.gmra.mxu0 %v1575
      %v2168 = vpop.f32.mrf.mxu0
      %v2169 = vadd.f32 %v2024, %v2168
      %v2170 = vpop.f32.mrf.mxu0
      %2171 = vmatprep.mubr.f32.mxu0 %v1584
      %2172 = vmatmul.mubr.f32.gmra.mxu0 %v1583
      %v2173 = vpop.f32.mrf.mxu0
      %v2174 = vadd.f32 %v2029, %v2173
      %v2175 = vpop.f32.mrf.mxu0
      %2176 = vmatprep.mubr.f32.mxu0 %v1592
      %2177 = vmatmul.mubr.f32.gmra.mxu0 %v1591
      %v2178 = vpop.f32.mrf.mxu0
      %v2179 = vadd.f32 %v2034, %v2178
      %v2180 = vpop.f32.mrf.mxu0
      %2181 = vmatprep.mubr.f32.mxu0 %v1600
      %2182 = vmatmul.mubr.f32.gmra.mxu0 %v1599
      %v2183 = vpop.f32.mrf.mxu0
      %v2184 = vadd.f32 %v2039, %v2183
      %v2185 = vpop.f32.mrf.mxu0
      %2186 = vmatprep.mubr.f32.mxu0 %v1608
      %2187 = vmatmul.mubr.f32.gmra.mxu0 %v1607
      %v2188 = vpop.f32.mrf.mxu0
      %v2189 = vadd.f32 %v2044, %v2188
      %v2190 = vpop.f32.mrf.mxu0
      %2191 = vmatprep.mubr.f32.mxu0 %v1616
      %2192 = vmatmul.mubr.f32.gmra.mxu0 %v1615
      %v2193 = vpop.f32.mrf.mxu0
      %v2194 = vadd.f32 %v2049, %v2193
      %v2195 = vpop.f32.mrf.mxu0
      %2196 = vmatprep.mubr.f32.mxu0 %v1624
      %2197 = vmatmul.mubr.f32.gmra.mxu0 %v1623
      %v2198 = vpop.f32.mrf.mxu0
      %v2199 = vadd.f32 %v2054, %v2198
      %v2200 = vpop.f32.mrf.mxu0
      %2201 = vmatprep.mubr.f32.mxu0 %v1632
      %2202 = vmatmul.mubr.f32.gmra.mxu0 %v1631
      %v2203 = vpop.f32.mrf.mxu0
      %v2204 = vadd.f32 %v2059, %v2203
      %v2205 = vpop.f32.mrf.mxu0
      %2206 = vmatprep.mubr.f32.mxu0 %v1640
      %2207 = vmatmul.mubr.f32.gmra.mxu0 %v1639
      %v2208 = vpop.f32.mrf.mxu0
      %v2209 = vadd.f32 %v2064, %v2208
      %v2210 = vpop.f32.mrf.mxu0
      %2211 = vmatprep.mubr.f32.mxu0 %v1648
      %2212 = vmatmul.mubr.f32.gmra.mxu0 %v1647
      %v2213 = vpop.f32.mrf.mxu0
      %v2214 = vadd.f32 %v2069, %v2213
      %v2215 = vpop.f32.mrf.mxu0
      %2216 = vmatprep.mubr.f32.mxu0 %v1656
      %2217 = vmatmul.mubr.f32.gmra.mxu0 %v1655
      %v2218 = vpop.f32.mrf.mxu0
      %v2219 = vadd.f32 %v2074, %v2218
      %v2220 = vpop.f32.mrf.mxu0
      %2221 = vdwg.mxu0
      %2222 = vmatprep.subr.mxu0 0.0
      %2223 = vmatpush1.msra.mxu0 %v1770
      %2224 = vmatprep.subr.mxu0 0.0
      %2225 = vmatpush1.msra.mxu0 %v1769
      %2226 = vmatprep.subr.mxu0 0.0
      %2227 = vmatpush1.msra.mxu0 %v1768
      %2228 = vmatprep.subr.mxu0 0.0
      %2229 = vmatpush1.msra.mxu0 %v1767
      %2230 = vmatprep.subr.mxu0 0.0
      %2231 = vmatpush1.msra.mxu0 %v1766
      %2232 = vmatprep.subr.mxu0 0.0
      %2233 = vmatpush1.msra.mxu0 %v1765
      %2234 = vmatprep.subr.mxu0 0.0
      %2235 = vmatpush1.msra.mxu0 %v1764
      %2236 = vmatprep.subr.mxu0 0.0
      %2237 = vmatpush1.msra.mxu0 %v1763
      %2238 = vmatprep.subr.mxu0 0.0
      %2239 = vmatpush1.msra.mxu0 %v1762
      %2240 = vmatprep.subr.mxu0 0.0
      %2241 = vmatpush1.msra.mxu0 %v1761
      %2242 = vmatprep.subr.mxu0 0.0
      %2243 = vmatpush1.msra.mxu0 %v1760
      %2244 = vmatprep.subr.mxu0 0.0
      %2245 = vmatpush1.msra.mxu0 %v1759
      %2246 = vmatprep.subr.mxu0 0.0
      %2247 = vmatpush1.msra.mxu0 %v1758
      %2248 = vmatprep.subr.mxu0 0.0
      %2249 = vmatpush1.msra.mxu0 %v1757
      %2250 = vmatprep.subr.mxu0 0.0
      %2251 = vmatpush1.msra.mxu0 %v1756
      %2252 = vmatprep.subr.mxu0 0.0
      %2253 = vmatpush1.msra.mxu0 %v1755
      %2254 = vmatprep.subr.mxu0 0.0
      %2255 = vmatpush2.msra.mxu0 %v1786
      %2256 = vmatprep.subr.mxu0 0.0
      %2257 = vmatpush2.msra.mxu0 %v1785
      %2258 = vmatprep.subr.mxu0 0.0
      %2259 = vmatpush2.msra.mxu0 %v1784
      %2260 = vmatprep.subr.mxu0 0.0
      %2261 = vmatpush2.msra.mxu0 %v1783
      %2262 = vmatprep.subr.mxu0 0.0
      %2263 = vmatpush2.msra.mxu0 %v1782
      %2264 = vmatprep.subr.mxu0 0.0
      %2265 = vmatpush2.msra.mxu0 %v1781
      %2266 = vmatprep.subr.mxu0 0.0
      %2267 = vmatpush2.msra.mxu0 %v1780
      %2268 = vmatprep.subr.mxu0 0.0
      %2269 = vmatpush2.msra.mxu0 %v1779
      %2270 = vmatprep.subr.mxu0 0.0
      %2271 = vmatpush2.msra.mxu0 %v1778
      %2272 = vmatprep.subr.mxu0 0.0
      %2273 = vmatpush2.msra.mxu0 %v1777
      %2274 = vmatprep.subr.mxu0 0.0
      %2275 = vmatpush2.msra.mxu0 %v1776
      %2276 = vmatprep.subr.mxu0 0.0
      %2277 = vmatpush2.msra.mxu0 %v1775
      %2278 = vmatprep.subr.mxu0 0.0
      %2279 = vmatpush2.msra.mxu0 %v1774
      %2280 = vmatprep.subr.mxu0 0.0
      %2281 = vmatpush2.msra.mxu0 %v1773
      %2282 = vmatprep.subr.mxu0 0.0
      %2283 = vmatpush2.msra.mxu0 %v1772
      %2284 = vmatprep.subr.mxu0 0.0
      %2285 = vmatpush2.msra.mxu0 %v1771
      %2286 = vmatprep.mubr.f32.mxu0 %v1538
      %2287 = vmatmul.mubr.f32.gmra.mxu0 %v1537
      %v2288 = vpop.f32.mrf.mxu0
      %v2289 = vadd.f32 %v2144, %v2288
      %v2290 = vpop.f32.mrf.mxu0
      %2291 = vmatprep.mubr.f32.mxu0 %v1546
      %2292 = vmatmul.mubr.f32.gmra.mxu0 %v1545
      %v2293 = vpop.f32.mrf.mxu0
      %v2294 = vadd.f32 %v2149, %v2293
      %v2295 = vpop.f32.mrf.mxu0
      %2296 = vmatprep.mubr.f32.mxu0 %v1554
      %2297 = vmatmul.mubr.f32.gmra.mxu0 %v1553
      %v2298 = vpop.f32.mrf.mxu0
      %v2299 = vadd.f32 %v2154, %v2298
      %v2300 = vpop.f32.mrf.mxu0
      %2301 = vmatprep.mubr.f32.mxu0 %v1562
      %2302 = vmatmul.mubr.f32.gmra.mxu0 %v1561
      %v2303 = vpop.f32.mrf.mxu0
      %v2304 = vadd.f32 %v2159, %v2303
      %v2305 = vpop.f32.mrf.mxu0
      %2306 = vmatprep.mubr.f32.mxu0 %v1570
      %2307 = vmatmul.mubr.f32.gmra.mxu0 %v1569
      %v2308 = vpop.f32.mrf.mxu0
      %v2309 = vadd.f32 %v2164, %v2308
      %v2310 = vpop.f32.mrf.mxu0
      %2311 = vmatprep.mubr.f32.mxu0 %v1578
      %2312 = vmatmul.mubr.f32.gmra.mxu0 %v1577
      %v2313 = vpop.f32.mrf.mxu0
      %v2314 = vadd.f32 %v2169, %v2313
      %v2315 = vpop.f32.mrf.mxu0
      %2316 = vmatprep.mubr.f32.mxu0 %v1586
      %2317 = vmatmul.mubr.f32.gmra.mxu0 %v1585
      %v2318 = vpop.f32.mrf.mxu0
      %v2319 = vadd.f32 %v2174, %v2318
      %v2320 = vpop.f32.mrf.mxu0
      %2321 = vmatprep.mubr.f32.mxu0 %v1594
      %2322 = vmatmul.mubr.f32.gmra.mxu0 %v1593
      %v2323 = vpop.f32.mrf.mxu0
      %v2324 = vadd.f32 %v2179, %v2323
      %v2325 = vpop.f32.mrf.mxu0
      %2326 = vmatprep.mubr.f32.mxu0 %v1602
      %2327 = vmatmul.mubr.f32.gmra.mxu0 %v1601
      %v2328 = vpop.f32.mrf.mxu0
      %v2329 = vadd.f32 %v2184, %v2328
      %v2330 = vpop.f32.mrf.mxu0
      %2331 = vmatprep.mubr.f32.mxu0 %v1610
      %2332 = vmatmul.mubr.f32.gmra.mxu0 %v1609
      %v2333 = vpop.f32.mrf.mxu0
      %v2334 = vadd.f32 %v2189, %v2333
      %v2335 = vpop.f32.mrf.mxu0
      %2336 = vmatprep.mubr.f32.mxu0 %v1618
      %2337 = vmatmul.mubr.f32.gmra.mxu0 %v1617
      %v2338 = vpop.f32.mrf.mxu0
      %v2339 = vadd.f32 %v2194, %v2338
      %v2340 = vpop.f32.mrf.mxu0
      %2341 = vmatprep.mubr.f32.mxu0 %v1626
      %2342 = vmatmul.mubr.f32.gmra.mxu0 %v1625
      %v2343 = vpop.f32.mrf.mxu0
      %v2344 = vadd.f32 %v2199, %v2343
      %v2345 = vpop.f32.mrf.mxu0
      %2346 = vmatprep.mubr.f32.mxu0 %v1634
      %2347 = vmatmul.mubr.f32.gmra.mxu0 %v1633
      %v2348 = vpop.f32.mrf.mxu0
      %v2349 = vadd.f32 %v2204, %v2348
      %v2350 = vpop.f32.mrf.mxu0
      %2351 = vmatprep.mubr.f32.mxu0 %v1642
      %2352 = vmatmul.mubr.f32.gmra.mxu0 %v1641
      %v2353 = vpop.f32.mrf.mxu0
      %v2354 = vadd.f32 %v2209, %v2353
      %v2355 = vpop.f32.mrf.mxu0
      %2356 = vmatprep.mubr.f32.mxu0 %v1650
      %2357 = vmatmul.mubr.f32.gmra.mxu0 %v1649
      %v2358 = vpop.f32.mrf.mxu0
      %v2359 = vadd.f32 %v2214, %v2358
      %v2360 = vpop.f32.mrf.mxu0
      %2361 = vmatprep.mubr.f32.mxu0 %v1658
      %2362 = vmatmul.mubr.f32.gmra.mxu0 %v1657
      %v2363 = vpop.f32.mrf.mxu0
      %v2364 = vadd.f32 %v2219, %v2363
      %v2365 = vpop.f32.mrf.mxu0
      %2366 = vdwg.mxu0
      %2367 = vst.msk [vmem:[%s302] sm:$0xff] %vm612, %v2289
      %2368 = vst.msk [vmem:[%s302 + $0x8] sm:$0xff] %vm612, %v2294
      %2369 = vst.msk [vmem:[%s302 + $0x10] sm:$0xff] %vm612, %v2299
      %2370 = vst.msk [vmem:[%s302 + $0x18] sm:$0xff] %vm612, %v2304
      %2371 = vst.msk [vmem:[%s302 + $0x20] sm:$0xff] %vm612, %v2309
      %2372 = vst.msk [vmem:[%s302 + $0x28] sm:$0xff] %vm612, %v2314
      %2373 = vst.msk [vmem:[%s302 + $0x30] sm:$0xff] %vm612, %v2319
      %2374 = vst.msk [vmem:[%s302 + $0x38] sm:$0xff] %vm612, %v2324
      %2375 = vst.msk [vmem:[%s302 + $0x40] sm:$0xff] %vm612, %v2329
      %2376 = vst.msk [vmem:[%s302 + $0x48] sm:$0xff] %vm612, %v2334
      %2377 = vst.msk [vmem:[%s302 + $0x50] sm:$0xff] %vm612, %v2339
      %2378 = vst.msk [vmem:[%s302 + $0x58] sm:$0xff] %vm612, %v2344
      %2379 = vst.msk [vmem:[%s302 + $0x60] sm:$0xff] %vm612, %v2349
      %2380 = vst.msk [vmem:[%s302 + $0x68] sm:$0xff] %vm612, %v2354
      %2381 = vst.msk [vmem:[%s302 + $0x70] sm:$0xff] %vm612, %v2359
      %2382 = vst.msk [vmem:[%s302 + $0x78] sm:$0xff] %vm612, %v2364
      %s2383 = smul.u32 16, %s18
      %p2384 = scmp.lt.s32.totalorder %s2383, 31
      %s2385 = scalar_select %p2384, %s2383, 31
      %s2386 = smul.addr %s2385, 8
      %s2387 = scalar_lea.vmem %s7, %s2386
      // Predicated region
      $region49: #{tpu_custom_call.1} parent=47 // pred_check
        %p2388 = pneg %p193
      $region50: #{tpu_custom_call.1} parent=47 // pred_check_branch
        %2390 = sbr.rel (%p2388) target = $region52
      $region51: #{tpu_custom_call.1} parent=47 // pred_region
        %s2391 = smul.u32 16, %s18
      $region52: #{tpu_custom_call.1} parent=47 // pred_fallthru
        _
    $region48: #{tpu_custom_call.1} parent=5 // pred_fallthru
      _
    %p2392 = scmp.le.s32.totalorder 2, %s13
    // Predicated region
    $region53: #{tpu_custom_call.1} parent=5 // pred_check
      %p2393 = pneg %p2392
    $region54: #{tpu_custom_call.1} parent=5 // pred_check_branch
      %2395 = sbr.rel (%p2393) target = $region56
    $region55: #{tpu_custom_call.1} parent=5 // pred_region
      %s2396 = ssub.s32 %s13, 2
      // Predicated region
      $region57: #{tpu_custom_call.1} parent=55 // pred_check
        %p2397 = pneg %p199
      $region58: #{tpu_custom_call.1} parent=55 // pred_check_branch
        %2399 = sbr.rel (%p2397) target = $region60
      $region59: #{tpu_custom_call.1} parent=55 // pred_region
        %s2400 = smul.u32 16, %s19
        %p2401 = scmp.lt.s32.totalorder %s2400, 31
        %s2402 = scalar_select %p2401, %s2400, 31
        %s2403 = smul.addr %s2402, 8
        %s2404 = scalar_lea.vmem %s7, %s2403
      $region60: #{tpu_custom_call.1} parent=55 // pred_fallthru
        _
    $region56: #{tpu_custom_call.1} parent=5 // pred_fallthru
      _
  $region6: #{tpu_custom_call.1} parent=0 // loop_footer
    %s17 = sadd.s32 1, %s13
  $region7: #{tpu_custom_call.1} parent=0 // loop_footer_branch
    %12 = sbr.rel target = $region3
  $region8: #{tpu_custom_call.1} parent=0 // loop_exit
    _

</llo_original>
